<compile_context>
chip_gen: v7x
topology: tpu7x:2x2x1
jax: 0.10.0
libtpu: 0.0.40
codegen_flags: <defaults>
</compile_context>

<pallas_src>
import jax
import jax.numpy as jnp
import numpy as np
from jax.experimental import pallas as pl
from jax.experimental.pallas import tpu as pltpu

_LANE = 128  # TPU lane width; feature dims are padded to multiples of this.
_PARAM_KEYS = ("w1", "b1", "w2", "b2", "w3", "b3", "w4", "b4", "w5", "b5")


def _round_up(x, m):
    return ((x + m - 1) // m) * m


# ----------------------------------------------------------------------------
# Kernel
# ----------------------------------------------------------------------------
def _mlp_kernel(x_ref,
                w1_ref, b1_ref,
                w2_ref, b2_ref,
                w3_ref, b3_ref,
                w4_ref, b4_ref,
                w5_ref, b5_ref,
                o_ref):
    """Fused forward pass of MultiLayerNet for one batch tile."""
    cdt = w1_ref.dtype  # MXU operand dtype (bf16 by default)

    def linear(h_lowp, w_ref, b_ref):
        # bf16 x bf16 -> f32 accumulation on the MXU; f32 bias broadcast.
        return (jnp.dot(h_lowp, w_ref[...], preferred_element_type=jnp.float32)
                + b_ref[...])

    x = x_ref[...].astype(cdt)
    # Residual carries (y1, y2) stay in bf16: the same copy feeds both the next
    # matmul and the residual add (widened to f32 only for the add).  Bias add
    # and tanh stay in f32.
    y1 = jnp.tanh(linear(x, w1_ref, b1_ref)).astype(cdt)
    y2 = jnp.tanh(linear(y1, w2_ref, b2_ref)).astype(cdt)
    y3 = (jnp.tanh(linear(y2, w3_ref, b3_ref))
          + y1.astype(jnp.float32)).astype(cdt)
    y4 = (jnp.tanh(linear(y3, w4_ref, b4_ref))
          + y2.astype(jnp.float32)).astype(cdt)
    y = linear(y4, w5_ref, b5_ref)
    o_ref[...] = y.astype(o_ref.dtype)


# ----------------------------------------------------------------------------
# One-time parameter preparation (not per forward call)
# ----------------------------------------------------------------------------
def prepare_params(params, *, compute_dtype=jnp.bfloat16):
    """Transpose (out,in)->(in,out) weights, cast to bf16, pad feature dims to
    multiples of 128 (lane-dense tiles).  Biases stay f32 as (1, out) rows."""
    D_in = params["w1"].shape[1]
    H = params["w1"].shape[0]
    D_out = params["w5"].shape[0]
    D_in_p = _round_up(D_in, _LANE)
    H_p = _round_up(H, _LANE)
    D_out_p = _round_up(D_out, _LANE)

    def prep_w(w, rows_p, cols_p):
        wt = jnp.asarray(w).T.astype(compute_dtype)  # (in, out)
        return jnp.pad(wt, ((0, rows_p - wt.shape[0]),
                            (0, cols_p - wt.shape[1])))

    def prep_b(b, cols_p):
        b = jnp.asarray(b).astype(jnp.float32).reshape(1, -1)
        return jnp.pad(b, ((0, 0), (0, cols_p - b.shape[1])))

    return {
        "w1": prep_w(params["w1"], D_in_p, H_p), "b1": prep_b(params["b1"], H_p),
        "w2": prep_w(params["w2"], H_p, H_p),    "b2": prep_b(params["b2"], H_p),
        "w3": prep_w(params["w3"], H_p, H_p),    "b3": prep_b(params["b3"], H_p),
        "w4": prep_w(params["w4"], H_p, H_p),    "b4": prep_b(params["b4"], H_p),
        "w5": prep_w(params["w5"], H_p, D_out_p),"b5": prep_b(params["b5"], D_out_p),
        "dims": (D_in, H, D_out, D_in_p, H_p, D_out_p),
    }


# ----------------------------------------------------------------------------
# Hardware / capability queries (cached, out of the hot path)
# ----------------------------------------------------------------------------
def _device_kind():
    try:
        return jax.devices()[0].device_kind.lower()
    except Exception:
        return ""


def _vmem_capacity_bytes():
    """Physical per-core VMEM (falls back to the smallest generation, 64 MiB)."""
    try:
        cap = getattr(pltpu.get_tpu_info(), "vmem_capacity_bytes", None)
        if cap:
            return int(cap)
    except Exception:
        pass
    return 64 * 2**20


def _batch_dim_semantics():
    """Use CORE_PARALLEL on multi-TensorCore chips (v7x) so both cores work;
    plain 'parallel' elsewhere (measured near-identical to 'arbitrary')."""
    core_parallel = getattr(pltpu, "CORE_PARALLEL", None)
    if core_parallel is not None and "v7" in _device_kind():
        return (core_parallel,)
    return ("parallel",)


_SINGLE_BUFFER_OK = None


def _probe_single_buffer_support():
    """One-time cached capability probe: does this Pallas build accept
    pipeline_mode=pl.Buffered(1) on a grid-invariant BlockSpec?  The probe is a
    trivial throwaway kernel, so the real kernel is never compiled twice and
    its genuine lowering errors are never swallowed."""
    global _SINGLE_BUFFER_OK
    if _SINGLE_BUFFER_OK is not None:
        return _SINGLE_BUFFER_OK
    if not hasattr(pl, "Buffered"):
        _SINGLE_BUFFER_OK = False
        return False

    def _probe_kernel(c_ref, x_ref, o_ref):
        o_ref[...] = x_ref[...] + c_ref[...]

    try:
        c = jnp.zeros((8, 128), jnp.float32)
        x = jnp.zeros((16, 128), jnp.float32)
        fn = pl.pallas_call(
            _probe_kernel,
            out_shape=jax.ShapeDtypeStruct((16, 128), jnp.float32),
            grid_spec=pltpu.PrefetchScalarGridSpec(
                num_scalar_prefetch=0,
                grid=(2,),
                in_specs=[pl.BlockSpec((8, 128), lambda i: (0, 0),
                                       pipeline_mode=pl.Buffered(1)),
                          pl.BlockSpec((8, 128), lambda i: (i, 0))],
                out_specs=pl.BlockSpec((8, 128), lambda i: (i, 0)),
            ),
        )
        jax.block_until_ready(fn(c, x))
        _SINGLE_BUFFER_OK = True
    except Exception:
        _SINGLE_BUFFER_OK = False
    return _SINGLE_BUFFER_OK


# ----------------------------------------------------------------------------
# Forward wrapper
# ----------------------------------------------------------------------------
def multilayer_net_forward(x, prepared, *, block_n=256, out_dtype=jnp.float32):
    """Fused MLP forward. x: (N, D_in). Returns (N, D_out) in `out_dtype`.

    block_n defaults to 256 rows: fills the 256-wide MXU (v6e/v7x) in M and
    amortizes the ~0.35 us per-grid-step pipeline overhead; keep it a multiple
    of 8.  Pass out_dtype=jnp.bfloat16 to halve output write-back if downstream
    accepts bf16 (note: with D_out=32 the 128-lane-padded f32 output already
    stores 4x the useful bytes).
    """
    D_in, H, D_out, D_in_p, H_p, D_out_p = prepared["dims"]
    N = x.shape[0]
    assert x.shape[1] == D_in, f"expected x with {D_in} features, got {x.shape[1]}"
    assert block_n % 8 == 0, "block_n must be a multiple of 8"

    # Shrink the tile for small batches so we never pad far past N.
    block_n = max(8, min(block_n, _round_up(N, 8)))

    # Pad batch to a multiple of block_n and features to the lane-padded width.
    N_p = _round_up(max(N, block_n), block_n)
    if N_p != N or D_in_p != D_in:
        x = jnp.pad(x, ((0, N_p - N), (0, D_in_p - D_in)))
    grid = (N_p // block_n,)

    single_buffer = _probe_single_buffer_support()

    # --- per-generation VMEM budget (always set explicitly so the 16 MiB v5e
    # scoped default can never under-provision) ---
    w_bytes = sum(int(np.prod(prepared[k].shape)) *
                  jnp.dtype(prepared[k].dtype).itemsize for k in _PARAM_KEYS)
    weight_copies = 1 if single_buffer else 2
    est = (weight_copies * w_bytes
           + 2 * block_n * (D_in_p + D_out_p) * 4      # double-buffered x / out
           + 4 * block_n * H_p * 4)                     # live f32 intermediates
    cap = (7 * _vmem_capacity_bytes()) // 8             # ~87% physical -> headroom
    vmem_limit = min(max((est * 6) // 5, 32 * 2**20), cap)

    operands = (x,) + tuple(prepared[k] for k in _PARAM_KEYS)

    def const_spec(shape):
        if single_buffer:
            # Grid-invariant block (index_map always (0, 0)): one buffer.
            return pl.BlockSpec(shape, lambda i: (0, 0),
                                pipeline_mode=pl.Buffered(1))
        return pl.BlockSpec(shape, lambda i: (0, 0))

    in_specs = [pl.BlockSpec((block_n, D_in_p), lambda i: (i, 0))]
    in_specs += [const_spec(prepared[k].shape) for k in _PARAM_KEYS]
    out_spec = pl.BlockSpec((block_n, D_out_p), lambda i: (i, 0))

    out = pl.pallas_call(
        _mlp_kernel,
        out_shape=jax.ShapeDtypeStruct((N_p, D_out_p), out_dtype),
        grid_spec=pltpu.PrefetchScalarGridSpec(
            num_scalar_prefetch=0,
            grid=grid,
            in_specs=in_specs,
            out_specs=out_spec,
        ),
        compiler_params=pltpu.CompilerParams(
            dimension_semantics=_batch_dim_semantics(),
            vmem_limit_bytes=vmem_limit,
        ),
    )(*operands)

    return out[:N, :D_out]


# ----------------------------------------------------------------------------
# Init + pure-JAX reference (matches the PyTorch module)
# ----------------------------------------------------------------------------
def init_params(key, D_in, H, D_out, dtype=jnp.float32):
    """Weights ~ N(0, sqrt(2/(fan_in+fan_out))), biases ~ N(0, 1).
    Weight shapes follow PyTorch Linear: (out, in)."""
    keys = jax.random.split(key, 10)
    std1 = np.sqrt(2.0 / (D_in + H))
    stdh = np.sqrt(2.0 / (H + H))
    std5 = np.sqrt(2.0 / (H + D_out))
    return {
        "w1": jax.random.normal(keys[0], (H, D_in), dtype) * std1,
        "w2": jax.random.normal(keys[1], (H, H), dtype) * stdh,
        "w3": jax.random.normal(keys[2], (H, H), dtype) * stdh,
        "w4": jax.random.normal(keys[3], (H, H), dtype) * stdh,
        "w5": jax.random.normal(keys[4], (D_out, H), dtype) * std5,
        "b1": jax.random.normal(keys[5], (H,), dtype),
        "b2": jax.random.normal(keys[6], (H,), dtype),
        "b3": jax.random.normal(keys[7], (H,), dtype),
        "b4": jax.random.normal(keys[8], (H,), dtype),
        "b5": jax.random.normal(keys[9], (D_out,), dtype),
    }


def reference_forward(x, p):
    """Plain-JAX f32 reference matching the PyTorch forward exactly."""
    y1 = jnp.tanh(x @ p["w1"].T + p["b1"])
    y2 = jnp.tanh(y1 @ p["w2"].T + p["b2"])
    y3 = jnp.tanh(y2 @ p["w3"].T + p["b3"]) + y1
    y4 = jnp.tanh(y3 @ p["w4"].T + p["b4"]) + y2
    return y4 @ p["w5"].T + p["b5"]


if __name__ == "__main__":
    # Small but representative shapes: batch 512 with block_n=256 -> a 2-step
    # grid (pipelined x/out DMAs, core-shardable on v7x); D_in=64 / D_out=32
    # exercise the lane-padding path, H=128 is already lane-dense.
    D_in, H, D_out = 64, 128, 32
    N = 512

    key = jax.random.PRNGKey(0)
    pkey, xkey = jax.random.split(key)
    params = init_params(pkey, D_in, H, D_out)
    prepared = prepare_params(params)  # one-time prep, reused across calls
    x = jax.random.normal(xkey, (N, D_in), jnp.float32)

    y = multilayer_net_forward(x, prepared, block_n=256)
    y = jax.block_until_ready(y)

    # Reference is full-f32 (matches the PyTorch module); the kernel uses bf16
    # MXU operands / bf16 residual carries with f32 accumulation, so compare at
    # bf16-level tolerance.
    y_ref = reference_forward(x, params)
    np.testing.assert_allclose(np.asarray(y), np.asarray(y_ref),
                               rtol=5e-2, atol=5e-2)

    print("KERNEL_OK")
</pallas_src>

<mosaic_0001>
module attributes {stable_mosaic.version = 11 : i64} {
  func.func @_probe_kernel(%arg0: i32, %arg1: memref<8x128xf32, #tpu.memory_space<vmem>>, %arg2: memref<8x128xf32, #tpu.memory_space<vmem>>, %arg3: memref<8x128xf32, #tpu.memory_space<vmem>>) attributes {dimension_semantics = [#tpu.dimension_semantics<arbitrary>], iteration_bounds = array<i64: 2>, scalar_prefetch = 0 : i64, scratch_operands = 0 : i64, tpu.core_type = #tpu.core_type<tc>, window_params = [{pipeline_mode = #tpu.pipeline_mode<synchronous>, transform_indices = @transform_0, window_bounds = array<i64: 8, 128>}, {transform_indices = @transform_1, window_bounds = array<i64: 8, 128>}, {transform_indices = @transform_2, window_bounds = array<i64: 8, 128>}]} {
    %c0 = arith.constant 0 : index
    %c0_0 = arith.constant 0 : index
    %0 = vector.load %arg2[%c0, %c0_0] : memref<8x128xf32, #tpu.memory_space<vmem>>, vector<8x128xf32>
    %c0_1 = arith.constant 0 : index
    %c0_2 = arith.constant 0 : index
    %1 = vector.load %arg1[%c0_1, %c0_2] : memref<8x128xf32, #tpu.memory_space<vmem>>, vector<8x128xf32>
    %2 = arith.addf %0, %1 : vector<8x128xf32>
    %c0_3 = arith.constant 0 : index
    %c0_4 = arith.constant 0 : index
    %3 = vector.load %arg3[%c0_3, %c0_4] : memref<8x128xf32, #tpu.memory_space<vmem>>, vector<8x128xf32>
    tpu.vector_store %arg3[%c0_3, %c0_4], %2 {strides = array<i32>} : memref<8x128xf32, #tpu.memory_space<vmem>>, vector<8x128xf32>,
    return
  }
  func.func @transform_0(%arg0: i32) -> (i32, i32) {
    %c0_i32 = arith.constant 0 : i32
    %c0_i32_0 = arith.constant 0 : i32
    %c0_i32_1 = arith.constant 0 : i32
    return %c0_i32, %c0_i32_0 : i32, i32
  }
  func.func @transform_1(%arg0: i32) -> (i32, i32) {
    %c0_i32 = arith.constant 0 : i32
    %c0_i32_0 = arith.constant 0 : i32
    return %arg0, %c0_i32 : i32, i32
  }
  func.func @transform_2(%arg0: i32) -> (i32, i32) {
    %c0_i32 = arith.constant 0 : i32
    %c0_i32_0 = arith.constant 0 : i32
    return %arg0, %c0_i32 : i32, i32
  }
}

module attributes {stable_mosaic.version = 11 : i64} {
  func.func @_mlp_kernel(%arg0: i32, %arg1: memref<256x128xf32, #tpu.memory_space<vmem>>, %arg2: memref<128x128xbf16, #tpu.memory_space<vmem>>, %arg3: memref<1x128xf32, #tpu.memory_space<vmem>>, %arg4: memref<128x128xbf16, #tpu.memory_space<vmem>>, %arg5: memref<1x128xf32, #tpu.memory_space<vmem>>, %arg6: memref<128x128xbf16, #tpu.memory_space<vmem>>, %arg7: memref<1x128xf32, #tpu.memory_space<vmem>>, %arg8: memref<128x128xbf16, #tpu.memory_space<vmem>>, %arg9: memref<1x128xf32, #tpu.memory_space<vmem>>, %arg10: memref<128x128xbf16, #tpu.memory_space<vmem>>, %arg11: memref<1x128xf32, #tpu.memory_space<vmem>>, %arg12: memref<256x128xf32, #tpu.memory_space<vmem>>) attributes {dimension_semantics = [#tpu.dimension_semantics<parallel>], iteration_bounds = array<i64: 2>, scalar_prefetch = 0 : i64, scratch_operands = 0 : i64, tpu.core_type = #tpu.core_type<tc>, window_params = [{transform_indices = @transform_0, window_bounds = array<i64: 256, 128>}, {pipeline_mode = #tpu.pipeline_mode<synchronous>, transform_indices = @transform_1, window_bounds = array<i64: 128, 128>}, {pipeline_mode = #tpu.pipeline_mode<synchronous>, transform_indices = @transform_2, window_bounds = array<i64: 1, 128>}, {pipeline_mode = #tpu.pipeline_mode<synchronous>, transform_indices = @transform_3, window_bounds = array<i64: 128, 128>}, {pipeline_mode = #tpu.pipeline_mode<synchronous>, transform_indices = @transform_4, window_bounds = array<i64: 1, 128>}, {pipeline_mode = #tpu.pipeline_mode<synchronous>, transform_indices = @transform_5, window_bounds = array<i64: 128, 128>}, {pipeline_mode = #tpu.pipeline_mode<synchronous>, transform_indices = @transform_6, window_bounds = array<i64: 1, 128>}, {pipeline_mode = #tpu.pipeline_mode<synchronous>, transform_indices = @transform_7, window_bounds = array<i64: 128, 128>}, {pipeline_mode = #tpu.pipeline_mode<synchronous>, transform_indices = @transform_8, window_bounds = array<i64: 1, 128>}, {pipeline_mode = #tpu.pipeline_mode<synchronous>, transform_indices = @transform_9, window_bounds = array<i64: 128, 128>}, {pipeline_mode = #tpu.pipeline_mode<synchronous>, transform_indices = @transform_10, window_bounds = array<i64: 1, 128>}, {transform_indices = @transform_11, window_bounds = array<i64: 256, 128>}]} {
    %c0 = arith.constant 0 : index
    %c0_0 = arith.constant 0 : index
    %0 = vector.load %arg1[%c0, %c0_0] : memref<256x128xf32, #tpu.memory_space<vmem>>, vector<256x128xf32>
    %1 = arith.truncf %0 : vector<256x128xf32> to vector<256x128xbf16>
    %c0_1 = arith.constant 0 : index
    %c0_2 = arith.constant 0 : index
    %2 = vector.load %arg2[%c0_1, %c0_2] : memref<128x128xbf16, #tpu.memory_space<vmem>>, vector<128x128xbf16>
    %cst = arith.constant dense<0.000000e+00> : vector<256x128xf32>
    %3 = tpu.matmul %1, %2, %cst {dimension_numbers = #tpu.dot_dimension_numbers<[1], [0], [0], [1], [0, 0, 1, 1], [], []>} : vector<256x128xbf16>, vector<128x128xbf16>, vector<256x128xf32> -> vector<256x128xf32>
    %c0_3 = arith.constant 0 : index
    %c0_4 = arith.constant 0 : index
    %4 = vector.load %arg3[%c0_3, %c0_4] : memref<1x128xf32, #tpu.memory_space<vmem>>, vector<1x128xf32>
    %5 = vector.broadcast %4 : vector<1x128xf32> to vector<256x128xf32>
    %6 = arith.addf %3, %5 : vector<256x128xf32>
    %7 = math.tanh %6 : vector<256x128xf32>
    %8 = arith.truncf %7 : vector<256x128xf32> to vector<256x128xbf16>
    %c0_5 = arith.constant 0 : index
    %c0_6 = arith.constant 0 : index
    %9 = vector.load %arg4[%c0_5, %c0_6] : memref<128x128xbf16, #tpu.memory_space<vmem>>, vector<128x128xbf16>
    %cst_7 = arith.constant dense<0.000000e+00> : vector<256x128xf32>
    %10 = tpu.matmul %8, %9, %cst_7 {dimension_numbers = #tpu.dot_dimension_numbers<[1], [0], [0], [1], [0, 0, 1, 1], [], []>} : vector<256x128xbf16>, vector<128x128xbf16>, vector<256x128xf32> -> vector<256x128xf32>
    %c0_8 = arith.constant 0 : index
    %c0_9 = arith.constant 0 : index
    %11 = vector.load %arg5[%c0_8, %c0_9] : memref<1x128xf32, #tpu.memory_space<vmem>>, vector<1x128xf32>
    %12 = vector.broadcast %11 : vector<1x128xf32> to vector<256x128xf32>
    %13 = arith.addf %10, %12 : vector<256x128xf32>
    %14 = math.tanh %13 : vector<256x128xf32>
    %15 = arith.truncf %14 : vector<256x128xf32> to vector<256x128xbf16>
    %c0_10 = arith.constant 0 : index
    %c0_11 = arith.constant 0 : index
    %16 = vector.load %arg6[%c0_10, %c0_11] : memref<128x128xbf16, #tpu.memory_space<vmem>>, vector<128x128xbf16>
    %cst_12 = arith.constant dense<0.000000e+00> : vector<256x128xf32>
    %17 = tpu.matmul %15, %16, %cst_12 {dimension_numbers = #tpu.dot_dimension_numbers<[1], [0], [0], [1], [0, 0, 1, 1], [], []>} : vector<256x128xbf16>, vector<128x128xbf16>, vector<256x128xf32> -> vector<256x128xf32>
    %c0_13 = arith.constant 0 : index
    %c0_14 = arith.constant 0 : index
    %18 = vector.load %arg7[%c0_13, %c0_14] : memref<1x128xf32, #tpu.memory_space<vmem>>, vector<1x128xf32>
    %19 = vector.broadcast %18 : vector<1x128xf32> to vector<256x128xf32>
    %20 = arith.addf %17, %19 : vector<256x128xf32>
    %21 = math.tanh %20 : vector<256x128xf32>
    %22 = arith.extf %8 : vector<256x128xbf16> to vector<256x128xf32>
    %23 = arith.addf %21, %22 : vector<256x128xf32>
    %24 = arith.truncf %23 : vector<256x128xf32> to vector<256x128xbf16>
    %c0_15 = arith.constant 0 : index
    %c0_16 = arith.constant 0 : index
    %25 = vector.load %arg8[%c0_15, %c0_16] : memref<128x128xbf16, #tpu.memory_space<vmem>>, vector<128x128xbf16>
    %cst_17 = arith.constant dense<0.000000e+00> : vector<256x128xf32>
    %26 = tpu.matmul %24, %25, %cst_17 {dimension_numbers = #tpu.dot_dimension_numbers<[1], [0], [0], [1], [0, 0, 1, 1], [], []>} : vector<256x128xbf16>, vector<128x128xbf16>, vector<256x128xf32> -> vector<256x128xf32>
    %c0_18 = arith.constant 0 : index
    %c0_19 = arith.constant 0 : index
    %27 = vector.load %arg9[%c0_18, %c0_19] : memref<1x128xf32, #tpu.memory_space<vmem>>, vector<1x128xf32>
    %28 = vector.broadcast %27 : vector<1x128xf32> to vector<256x128xf32>
    %29 = arith.addf %26, %28 : vector<256x128xf32>
    %30 = math.tanh %29 : vector<256x128xf32>
    %31 = arith.extf %15 : vector<256x128xbf16> to vector<256x128xf32>
    %32 = arith.addf %30, %31 : vector<256x128xf32>
    %33 = arith.truncf %32 : vector<256x128xf32> to vector<256x128xbf16>
    %c0_20 = arith.constant 0 : index
    %c0_21 = arith.constant 0 : index
    %34 = vector.load %arg10[%c0_20, %c0_21] : memref<128x128xbf16, #tpu.memory_space<vmem>>, vector<128x128xbf16>
    %cst_22 = arith.constant dense<0.000000e+00> : vector<256x128xf32>
    %35 = tpu.matmul %33, %34, %cst_22 {dimension_numbers = #tpu.dot_dimension_numbers<[1], [0], [0], [1], [0, 0, 1, 1], [], []>} : vector<256x128xbf16>, vector<128x128xbf16>, vector<256x128xf32> -> vector<256x128xf32>
    %c0_23 = arith.constant 0 : index
    %c0_24 = arith.constant 0 : index
    %36 = vector.load %arg11[%c0_23, %c0_24] : memref<1x128xf32, #tpu.memory_space<vmem>>, vector<1x128xf32>
    %37 = vector.broadcast %36 : vector<1x128xf32> to vector<256x128xf32>
    %38 = arith.addf %35, %37 : vector<256x128xf32>
    %c0_25 = arith.constant 0 : index
    %c0_26 = arith.constant 0 : index
    %39 = vector.load %arg12[%c0_25, %c0_26] : memref<256x128xf32, #tpu.memory_space<vmem>>, vector<256x128xf32>
    tpu.vector_store %arg12[%c0_25, %c0_26], %38 {strides = array<i32>} : memref<256x128xf32, #tpu.memory_space<vmem>>, vector<256x128xf32>,
    return
  }
  func.func @transform_0(%arg0: i32) -> (i32, i32) {
    %c0_i32 = arith.constant 0 : i32
    %c0_i32_0 = arith.constant 0 : i32
    return %arg0, %c0_i32 : i32, i32
  }
  func.func @transform_1(%arg0: i32) -> (i32, i32) {
    %c0_i32 = arith.constant 0 : i32
    %c0_i32_0 = arith.constant 0 : i32
    %c0_i32_1 = arith.constant 0 : i32
    return %c0_i32, %c0_i32_0 : i32, i32
  }
  func.func @transform_2(%arg0: i32) -> (i32, i32) {
    %c0_i32 = arith.constant 0 : i32
    %c0_i32_0 = arith.constant 0 : i32
    %c0_i32_1 = arith.constant 0 : i32
    return %c0_i32, %c0_i32_0 : i32, i32
  }
  func.func @transform_3(%arg0: i32) -> (i32, i32) {
    %c0_i32 = arith.constant 0 : i32
    %c0_i32_0 = arith.constant 0 : i32
    %c0_i32_1 = arith.constant 0 : i32
    return %c0_i32, %c0_i32_0 : i32, i32
  }
  func.func @transform_4(%arg0: i32) -> (i32, i32) {
    %c0_i32 = arith.constant 0 : i32
    %c0_i32_0 = arith.constant 0 : i32
    %c0_i32_1 = arith.constant 0 : i32
    return %c0_i32, %c0_i32_0 : i32, i32
  }
  func.func @transform_5(%arg0: i32) -> (i32, i32) {
    %c0_i32 = arith.constant 0 : i32
    %c0_i32_0 = arith.constant 0 : i32
    %c0_i32_1 = arith.constant 0 : i32
    return %c0_i32, %c0_i32_0 : i32, i32
  }
  func.func @transform_6(%arg0: i32) -> (i32, i32) {
    %c0_i32 = arith.constant 0 : i32
    %c0_i32_0 = arith.constant 0 : i32
    %c0_i32_1 = arith.constant 0 : i32
    return %c0_i32, %c0_i32_0 : i32, i32
  }
  func.func @transform_7(%arg0: i32) -> (i32, i32) {
    %c0_i32 = arith.constant 0 : i32
    %c0_i32_0 = arith.constant 0 : i32
    %c0_i32_1 = arith.constant 0 : i32
    return %c0_i32, %c0_i32_0 : i32, i32
  }
  func.func @transform_8(%arg0: i32) -> (i32, i32) {
    %c0_i32 = arith.constant 0 : i32
    %c0_i32_0 = arith.constant 0 : i32
    %c0_i32_1 = arith.constant 0 : i32
    return %c0_i32, %c0_i32_0 : i32, i32
  }
  func.func @transform_9(%arg0: i32) -> (i32, i32) {
    %c0_i32 = arith.constant 0 : i32
    %c0_i32_0 = arith.constant 0 : i32
    %c0_i32_1 = arith.constant 0 : i32
    return %c0_i32, %c0_i32_0 : i32, i32
  }
  func.func @transform_10(%arg0: i32) -> (i32, i32) {
    %c0_i32 = arith.constant 0 : i32
    %c0_i32_0 = arith.constant 0 : i32
    %c0_i32_1 = arith.constant 0 : i32
    return %c0_i32, %c0_i32_0 : i32, i32
  }
  func.func @transform_11(%arg0: i32) -> (i32, i32) {
    %c0_i32 = arith.constant 0 : i32
    %c0_i32_0 = arith.constant 0 : i32
    return %arg0, %c0_i32 : i32, i32
  }
}

</mosaic_0001>

<llo_original>
// kernel: tpu_custom_call.1
$region0: #{tpu_custom_call.1}
  #allocation0 [shape = 'u32[]', space=smem, size = 0x4, offset = 0x4, fixed_abs, tag = 'smem constant byte address 0x4 - core index']
  #allocation1 [shape = 'u32[144,128]{1,0:T(1,128)}', space=vmem, size = 0x12000, scoped, tag = 'internal scratch']
  %s0 = inlined_call_operand.hbm [shape: f32[8,128], index: 0, kind: input, shape index: {}]
  %s1 = inlined_call_operand.hbm [shape: f32[16,128], index: 1, kind: input, shape index: {}]
  %s2 = inlined_call_operand.hbm [shape: f32[16,128], index: 2, kind: output, shape index: {}]
  %s3 = sld [smem:[#allocation0]]
  $region49: #{tpu_custom_call.1} parent=0
    _
  %s5 = ssub.s32 1, %s3
  %s6 = scalar_select 0, %s5, %s3
  $region1: #{tpu_custom_call.1} parent=0
    #allocation2 [shape = 'u8[4096]{0}', space=vmem, size = 0x1000, scoped, tag = 'input window, operand 0, single buffered']
    #allocation3 [shape = 's32[2]{0}', space=sflag, size = 0x8, scoped, tag = 'scoped memory for tpu_custom_call.1']
    #allocation4 [shape = 's32[2]{0}', space=sflag, size = 0x8, scoped, tag = 'scoped memory for tpu_custom_call.1']
    #allocation5 [shape = 'u8[8192]{0}', space=vmem, size = 0x2000, scoped, tag = 'input window, operand 1']
    #allocation6 [shape = 's32[2]{0}', space=sflag, size = 0x8, scoped, tag = 'scoped memory for tpu_custom_call.1']
    #allocation7 [shape = 'u8[8192]{0}', space=vmem, size = 0x2000, scoped, tag = 'output window, operand 0']
    %7 = vsyncpa [#allocation3], 0
    %8 = vsyncpa [#allocation6], 0
    %s9 = scalar_lea.sflag [#allocation6], 1
    %10 = vsyncpa %s9, 0
    %11 = vsyncpa [#allocation4], 0
    %s12 = scalar_lea.sflag [#allocation4], 1
    %13 = vsyncpa %s12, 0
    loop: start=0, step=1, limit=4
    $region2: #{tpu_custom_call.1} parent=1 // loop_pre_header
      _
    $region3: #{tpu_custom_call.1} parent=1 // loop_header
      %s15 = sphi 0, %s19
      %p16 = scmp.ge.s32.totalorder %s15, 4
      %s23 = sphi 0, %s23
      %s25 = sphi 0, %s23
      %s26 = sphi 0, %s25
      %s40 = sphi 0, %s26
      %s46 = sphi 0, %s48
      %s49 = sphi 0, %s46
      %s50 = sphi 0, %s49
      %s66 = sphi 0, %s50
      %s72 = sphi 0, %s74
      %s75 = sphi 0, %s72
      %s76 = sphi 0, %s75
      %s92 = sphi 0, %s76
    $region4: #{tpu_custom_call.1} parent=1 // loop_header_branch
      %18 = sbr.rel (%p16) target = $region8
    $region5: #{tpu_custom_call.1} parent=1 // loop_body
      %s20 = ssub.s32 %s15, 1
      %s21 = ssub.s32 %s15, 2
      %s22 = sadd.s32 %s15, 1
      %s24 = sadd.s32 %s23, 1
      %p27 = scmp.eq.s32.totalorder %s15, 1
      %p28 = scmp.ne.s32.totalorder %s23, %s25
      %p29 = scmp.eq.s32.totalorder %s15, 0
      %p30 = por %p28, %p29
      %p31 = scmp.ne.s32.totalorder %s23, %s25
      %p32 = scmp.eq.s32.totalorder %s20, 1
      %p33 = por %p31, %p32
      %p34 = scmp.ne.s32.totalorder %s25, %s26
      %p35 = scmp.eq.s32.totalorder %s20, 0
      %p36 = por %p34, %p35
      %p37 = scmp.ne.s32.totalorder %s25, %s26
      %p38 = scmp.eq.s32.totalorder %s21, 1
      %p39 = por %p37, %p38
      %p41 = scmp.ne.s32.totalorder %s26, %s40
      %p42 = scmp.eq.s32.totalorder %s21, 0
      %p43 = por %p41, %p42
      %s44 = ssub.s32 %s15, %s22
      %p45 = scmp.eq.s32.totalorder %s44, 0
      %s47 = sadd.s32 %s46, 1
      %s48 = scalar_select %p45, %s46, %s47
      %p51 = pneg %p45
      %p52 = scmp.eq.s32.totalorder %s15, 1
      %p53 = por %p51, %p52
      %p54 = scmp.ne.s32.totalorder %s46, %s49
      %p55 = scmp.eq.s32.totalorder %s15, 0
      %p56 = por %p54, %p55
      %p57 = scmp.ne.s32.totalorder %s46, %s49
      %p58 = scmp.eq.s32.totalorder %s20, 1
      %p59 = por %p57, %p58
      %p60 = scmp.ne.s32.totalorder %s49, %s50
      %p61 = scmp.eq.s32.totalorder %s20, 0
      %p62 = por %p60, %p61
      %p63 = scmp.ne.s32.totalorder %s49, %s50
      %p64 = scmp.eq.s32.totalorder %s21, 1
      %p65 = por %p63, %p64
      %p67 = scmp.ne.s32.totalorder %s50, %s66
      %p68 = scmp.eq.s32.totalorder %s21, 0
      %p69 = por %p67, %p68
      %s70 = ssub.s32 %s15, %s22
      %p71 = scmp.eq.s32.totalorder %s70, 0
      %s73 = sadd.s32 %s72, 1
      %s74 = scalar_select %p71, %s72, %s73
      %p77 = pneg %p71
      %p78 = scmp.eq.s32.totalorder %s15, 1
      %p79 = por %p77, %p78
      %p80 = scmp.ne.s32.totalorder %s72, %s75
      %p81 = scmp.eq.s32.totalorder %s15, 0
      %p82 = por %p80, %p81
      %p83 = scmp.ne.s32.totalorder %s72, %s75
      %p84 = scmp.eq.s32.totalorder %s20, 1
      %p85 = por %p83, %p84
      %p86 = scmp.ne.s32.totalorder %s75, %s76
      %p87 = scmp.eq.s32.totalorder %s20, 0
      %p88 = por %p86, %p87
      %p89 = scmp.ne.s32.totalorder %s75, %s76
      %p90 = scmp.eq.s32.totalorder %s21, 1
      %p91 = por %p89, %p90
      %p93 = scmp.ne.s32.totalorder %s76, %s92
      %p94 = scmp.eq.s32.totalorder %s21, 0
      %p95 = por %p93, %p94
      %p96 = scmp.le.s32.totalorder 1, %s15
      %p97 = scmp.lt.s32.totalorder %s15, 3
      %p98 = pnand %p96, %p97
      %p99 = pneg %p98
      // Predicated region
      $region9: #{tpu_custom_call.1} parent=5 // pred_check
        _
      $region10: #{tpu_custom_call.1} parent=5 // pred_check_branch
        %101 = sbr.rel (%p98) target = $region12
      $region11: #{tpu_custom_call.1} parent=5 // pred_region
        %s102 = ssub.s32 %s15, 1
        // Predicated region
        $region13: #{tpu_custom_call.1} parent=11 // pred_check
          %p103 = pneg %p36
        $region14: #{tpu_custom_call.1} parent=11 // pred_check_branch
          %105 = sbr.rel (%p103) target = $region16
        $region15: #{tpu_custom_call.1} parent=11 // pred_region
          %s107 = ssub.s32 128, 128
          %108 = vsyncadd [#allocation3], %s107
          %s110 = sshll.u32 [#allocation2], 4
          %s111 = int_to_ptr.vmem [resolvable:$true] %s110
          %113 = dma.hbm_to_vmem [thread:$0]  %s0, 128, %s111, [#allocation3]
        $region16: #{tpu_custom_call.1} parent=11 // pred_fallthru
          _
      $region12: #{tpu_custom_call.1} parent=5 // pred_fallthru
        _
      %p114 = scmp.lt.s32.totalorder %s15, 2
      // Predicated region
      $region17: #{tpu_custom_call.1} parent=5 // pred_check
        %p115 = pneg %p114
      $region18: #{tpu_custom_call.1} parent=5 // pred_check_branch
        %117 = sbr.rel (%p115) target = $region20
      $region19: #{tpu_custom_call.1} parent=5 // pred_region
        // Predicated region
        $region21: #{tpu_custom_call.1} parent=19 // pred_check
          %p118 = pneg %p56
        $region22: #{tpu_custom_call.1} parent=19 // pred_check_branch
          %120 = sbr.rel (%p118) target = $region24
        $region23: #{tpu_custom_call.1} parent=19 // pred_region
          %s121 = sand.u32 %s46, 1
          %s122 = scalar_lea.sflag [#allocation6], %s121
          %s123 = sand.u32 %s46, 1
          %s124 = smul.addr %s123, 8
          %s125 = scalar_lea.vmem [#allocation5], %s124
          %s127 = ssub.s32 128, 128
          %128 = vsyncadd %s122, %s127
          %s129 = smul.addr %s15, 128
          %s130 = scalar_lea.hbm %s1, %s129
          %s132 = sshll.u32 %s125, 4
          %s133 = int_to_ptr.vmem [resolvable:$true] %s132
          %135 = dma.hbm_to_vmem [thread:$0]  %s130, 128, %s133, %s122
        $region24: #{tpu_custom_call.1} parent=19 // pred_fallthru
          _
      $region20: #{tpu_custom_call.1} parent=5 // pred_fallthru
        _
      %p136 = scmp.le.s32.totalorder 1, %s15
      %p137 = scmp.lt.s32.totalorder %s15, 3
      %p138 = pnand %p136, %p137
      %p139 = pneg %p138
      // Predicated region
      $region25: #{tpu_custom_call.1} parent=5 // pred_check
        _
      $region26: #{tpu_custom_call.1} parent=5 // pred_check_branch
        %141 = sbr.rel (%p138) target = $region28
      $region27: #{tpu_custom_call.1} parent=5 // pred_region
        %s142 = ssub.s32 %s15, 1
        // Predicated region
        $region29: #{tpu_custom_call.1} parent=27 // pred_check
          %p143 = pneg %p36
        $region30: #{tpu_custom_call.1} parent=27 // pred_check_branch
          %145 = sbr.rel (%p143) target = $region32
        $region31: #{tpu_custom_call.1} parent=27 // pred_region
          %146 = dma.done [#allocation3], 128
        $region32: #{tpu_custom_call.1} parent=27 // pred_fallthru
          _
        %s147 = sand.u32 %s49, 1
        %s148 = scalar_lea.sflag [#allocation6], %s147
        %s149 = sand.u32 %s49, 1
        %s150 = smul.addr %s149, 8
        %s151 = scalar_lea.vmem [#allocation5], %s150
        // Predicated region
        $region33: #{tpu_custom_call.1} parent=27 // pred_check
          %p152 = pneg %p62
        $region34: #{tpu_custom_call.1} parent=27 // pred_check_branch
          %154 = sbr.rel (%p152) target = $region36
        $region35: #{tpu_custom_call.1} parent=27 // pred_region
          %155 = dma.done %s148, 128
        $region36: #{tpu_custom_call.1} parent=27 // pred_fallthru
          _
        %p156 = pneg %p36
        %p157 = pneg %p33
        %s158 = sand.u32 %s49, 1
        %s159 = scalar_lea.sflag [#allocation6], %s158
        %s160 = sand.u32 %s49, 1
        %s161 = smul.addr %s160, 8
        %s162 = scalar_lea.vmem [#allocation5], %s161
        %p163 = pneg %p62
        %p164 = pneg %p59
        %p165 = pneg %p88
        %p166 = pneg %p85
        %s167 = sand.u32 %s75, 1
        %s168 = scalar_lea.sflag [#allocation4], %s167
        %s169 = sand.u32 %s75, 1
        %s170 = smul.addr %s169, 8
        %s171 = scalar_lea.vmem [#allocation7], %s170
        %v172 = vld [vmem:[%s151] sm:$0xff]
        %v173 = vld [vmem:[#allocation2] sm:$0xff]
        %v174 = vadd.f32 %v172, %v173
        %175 = vst [vmem:[%s171] sm:$0xff] %v174
        %s176 = sand.u32 %s75, 1
        %s177 = scalar_lea.sflag [#allocation4], %s176
        %s178 = sand.u32 %s75, 1
        %s179 = smul.addr %s178, 8
        %s180 = scalar_lea.vmem [#allocation7], %s179
        // Predicated region
        $region37: #{tpu_custom_call.1} parent=27 // pred_check
          %p181 = pneg %p85
        $region38: #{tpu_custom_call.1} parent=27 // pred_check_branch
          %183 = sbr.rel (%p181) target = $region40
        $region39: #{tpu_custom_call.1} parent=27 // pred_region
          %s185 = ssub.s32 128, 128
          %186 = vsyncadd %s177, %s185
          %s187 = smul.addr %s20, 128
          %s188 = scalar_lea.hbm %s2, %s187
          %s190 = sshll.u32 %s180, 4
          %s191 = int_to_ptr.vmem [resolvable:$true] %s190
          %193 = dma.vmem_to_hbm [thread:$0]  %s191, 128, %s188, %s177
        $region40: #{tpu_custom_call.1} parent=27 // pred_fallthru
          _
      $region28: #{tpu_custom_call.1} parent=5 // pred_fallthru
        _
      %p194 = scmp.le.s32.totalorder 2, %s15
      // Predicated region
      $region41: #{tpu_custom_call.1} parent=5 // pred_check
        %p195 = pneg %p194
      $region42: #{tpu_custom_call.1} parent=5 // pred_check_branch
        %197 = sbr.rel (%p195) target = $region44
      $region43: #{tpu_custom_call.1} parent=5 // pred_region
        %s198 = ssub.s32 %s15, 2
        // Predicated region
        $region45: #{tpu_custom_call.1} parent=43 // pred_check
          %p199 = pneg %p91
        $region46: #{tpu_custom_call.1} parent=43 // pred_check_branch
          %201 = sbr.rel (%p199) target = $region48
        $region47: #{tpu_custom_call.1} parent=43 // pred_region
          %s202 = sand.u32 %s76, 1
          %s203 = scalar_lea.sflag [#allocation4], %s202
          %s204 = sand.u32 %s76, 1
          %s205 = smul.addr %s204, 8
          %s206 = scalar_lea.vmem [#allocation7], %s205
          %207 = dma.done %s203, 128
        $region48: #{tpu_custom_call.1} parent=43 // pred_fallthru
          _
      $region44: #{tpu_custom_call.1} parent=5 // pred_fallthru
        _
    $region6: #{tpu_custom_call.1} parent=1 // loop_footer
      %s19 = sadd.s32 1, %s15
    $region7: #{tpu_custom_call.1} parent=1 // loop_footer_branch
      %14 = sbr.rel target = $region3
    $region8: #{tpu_custom_call.1} parent=1 // loop_exit
      _
    %208 = vsyncpa [#allocation3], 1
    %s209 = scalar_lea.sflag [#allocation3], 1
    %210 = vsyncpa %s209, 1
    %211 = vsyncpa [#allocation6], 1
    %s212 = scalar_lea.sflag [#allocation6], 1
    %213 = vsyncpa %s212, 1
    %214 = vsyncpa [#allocation4], 1
    %s215 = scalar_lea.sflag [#allocation4], 1
    %216 = vsyncpa %s215, 1

// kernel: tpu_custom_call.1
$region0: #{tpu_custom_call.1}
  #allocation0 [shape = 'u32[]', space=smem, size = 0x4, offset = 0x4, fixed_abs, tag = 'smem constant byte address 0x4 - core index']
  #allocation1 [shape = 'u32[144,128]{1,0:T(1,128)}', space=vmem, size = 0x12000, scoped, tag = 'internal scratch']
  %s0 = inlined_call_operand.hbm [shape: f32[512,128], index: 0, kind: input, shape index: {}]
  %s1 = inlined_call_operand.hbm [shape: bf16[128,128], index: 1, kind: input, shape index: {}]
  %s2 = inlined_call_operand.vmem [shape: f32[1,128], index: 2, kind: input, shape index: {}]
  %s3 = inlined_call_operand.hbm [shape: bf16[128,128], index: 3, kind: input, shape index: {}]
  %s4 = inlined_call_operand.vmem [shape: f32[1,128], index: 4, kind: input, shape index: {}]
  %s5 = inlined_call_operand.hbm [shape: bf16[128,128], index: 5, kind: input, shape index: {}]
  %s6 = inlined_call_operand.vmem [shape: f32[1,128], index: 6, kind: input, shape index: {}]
  %s7 = inlined_call_operand.hbm [shape: bf16[128,128], index: 7, kind: input, shape index: {}]
  %s8 = inlined_call_operand.vmem [shape: f32[1,128], index: 8, kind: input, shape index: {}]
  %s9 = inlined_call_operand.hbm [shape: bf16[128,128], index: 9, kind: input, shape index: {}]
  %s10 = inlined_call_operand.vmem [shape: f32[1,128], index: 10, kind: input, shape index: {}]
  %s11 = inlined_call_operand.hbm [shape: f32[512,128], index: 11, kind: output, shape index: {}]
  %s12 = sld [smem:[#allocation0]]
  $region101: #{tpu_custom_call.1} parent=0
    _
  %s14 = ssub.s32 1, %s12
  %s15 = scalar_select 0, %s14, %s12
  $region1: #{tpu_custom_call.1} parent=0
    #allocation2 [shape = 'u8[262144]{0}', space=vmem, size = 0x40000, scoped, tag = 'input window, operand 0']
    #allocation3 [shape = 's32[2]{0}', space=sflag, size = 0x8, scoped, tag = 'scoped memory for tpu_custom_call.1']
    #allocation4 [shape = 's32[2]{0}', space=sflag, size = 0x8, scoped, tag = 'scoped memory for tpu_custom_call.1']
    #allocation5 [shape = 'u8[32768]{0}', space=vmem, size = 0x8000, scoped, tag = 'input window, operand 1, single buffered']
    #allocation6 [shape = 's32[1]{0}', space=sflag, size = 0x4, scoped, tag = 'scoped memory for tpu_custom_call.1']
    #allocation7 [shape = 'u8[32768]{0}', space=vmem, size = 0x8000, scoped, tag = 'input window, operand 3, single buffered']
    #allocation8 [shape = 'u8[32768]{0}', space=vmem, size = 0x8000, scoped, tag = 'input window, operand 5, single buffered']
    #allocation9 [shape = 's32[1]{0}', space=sflag, size = 0x4, scoped, tag = 'scoped memory for tpu_custom_call.1']
    #allocation10 [shape = 'u8[32768]{0}', space=vmem, size = 0x8000, scoped, tag = 'input window, operand 7, single buffered']
    #allocation11 [shape = 'u8[32768]{0}', space=vmem, size = 0x8000, scoped, tag = 'input window, operand 9, single buffered']
    #allocation12 [shape = 's32[1]{0}', space=sflag, size = 0x4, scoped, tag = 'scoped memory for tpu_custom_call.1']
    #allocation13 [shape = 'u8[262144]{0}', space=vmem, size = 0x40000, scoped, tag = 'output window, operand 0']
    %16 = vsyncpa [#allocation3], 0
    %s17 = scalar_lea.sflag [#allocation3], 1
    %18 = vsyncpa %s17, 0
    %19 = vsyncpa [#allocation6], 0
    %20 = vsyncpa [#allocation9], 0
    %21 = vsyncpa [#allocation12], 0
    %22 = vsyncpa [#allocation4], 0
    %s23 = scalar_lea.sflag [#allocation4], 1
    %24 = vsyncpa %s23, 0
    loop: start=0, step=1, limit=4
    $region2: #{tpu_custom_call.1} parent=1 // loop_pre_header
      _
    $region3: #{tpu_custom_call.1} parent=1 // loop_header
      %s26 = sphi 0, %s30
      %p27 = scmp.ge.s32.totalorder %s26, 4
      %s36 = sphi 0, %s38
      %s39 = sphi 0, %s36
      %s40 = sphi 0, %s39
      %s56 = sphi 0, %s40
      %s60 = sphi 0, %s60
      %s62 = sphi 0, %s60
      %s63 = sphi 0, %s62
      %s77 = sphi 0, %s63
      %s81 = sphi 0, %s81
      %s83 = sphi 0, %s81
      %s84 = sphi 0, %s83
      %s98 = sphi 0, %s84
      %s102 = sphi 0, %s102
      %s104 = sphi 0, %s102
      %s105 = sphi 0, %s104
      %s119 = sphi 0, %s105
      %s123 = sphi 0, %s123
      %s125 = sphi 0, %s123
      %s126 = sphi 0, %s125
      %s140 = sphi 0, %s126
      %s144 = sphi 0, %s144
      %s146 = sphi 0, %s144
      %s147 = sphi 0, %s146
      %s161 = sphi 0, %s147
      %s165 = sphi 0, %s165
      %s167 = sphi 0, %s165
      %s168 = sphi 0, %s167
      %s182 = sphi 0, %s168
      %s186 = sphi 0, %s186
      %s188 = sphi 0, %s186
      %s189 = sphi 0, %s188
      %s203 = sphi 0, %s189
      %s207 = sphi 0, %s207
      %s209 = sphi 0, %s207
      %s210 = sphi 0, %s209
      %s224 = sphi 0, %s210
      %s228 = sphi 0, %s228
      %s230 = sphi 0, %s228
      %s231 = sphi 0, %s230
      %s245 = sphi 0, %s231
      %s249 = sphi 0, %s249
      %s251 = sphi 0, %s249
      %s252 = sphi 0, %s251
      %s266 = sphi 0, %s252
      %s272 = sphi 0, %s274
      %s275 = sphi 0, %s272
      %s276 = sphi 0, %s275
      %s292 = sphi 0, %s276
    $region4: #{tpu_custom_call.1} parent=1 // loop_header_branch
      %29 = sbr.rel (%p27) target = $region8
    $region5: #{tpu_custom_call.1} parent=1 // loop_body
      %s31 = ssub.s32 %s26, 1
      %s32 = ssub.s32 %s26, 2
      %s33 = sadd.s32 %s26, 1
      %s34 = ssub.s32 %s26, %s33
      %p35 = scmp.eq.s32.totalorder %s34, 0
      %s37 = sadd.s32 %s36, 1
      %s38 = scalar_select %p35, %s36, %s37
      %p41 = pneg %p35
      %p42 = scmp.eq.s32.totalorder %s26, 1
      %p43 = por %p41, %p42
      %p44 = scmp.ne.s32.totalorder %s36, %s39
      %p45 = scmp.eq.s32.totalorder %s26, 0
      %p46 = por %p44, %p45
      %p47 = scmp.ne.s32.totalorder %s36, %s39
      %p48 = scmp.eq.s32.totalorder %s31, 1
      %p49 = por %p47, %p48
      %p50 = scmp.ne.s32.totalorder %s39, %s40
      %p51 = scmp.eq.s32.totalorder %s31, 0
      %p52 = por %p50, %p51
      %p53 = scmp.ne.s32.totalorder %s39, %s40
      %p54 = scmp.eq.s32.totalorder %s32, 1
      %p55 = por %p53, %p54
      %p57 = scmp.ne.s32.totalorder %s40, %s56
      %p58 = scmp.eq.s32.totalorder %s32, 0
      %p59 = por %p57, %p58
      %s61 = sadd.s32 %s60, 1
      %p64 = scmp.eq.s32.totalorder %s26, 1
      %p65 = scmp.ne.s32.totalorder %s60, %s62
      %p66 = scmp.eq.s32.totalorder %s26, 0
      %p67 = por %p65, %p66
      %p68 = scmp.ne.s32.totalorder %s60, %s62
      %p69 = scmp.eq.s32.totalorder %s31, 1
      %p70 = por %p68, %p69
      %p71 = scmp.ne.s32.totalorder %s62, %s63
      %p72 = scmp.eq.s32.totalorder %s31, 0
      %p73 = por %p71, %p72
      %p74 = scmp.ne.s32.totalorder %s62, %s63
      %p75 = scmp.eq.s32.totalorder %s32, 1
      %p76 = por %p74, %p75
      %p78 = scmp.ne.s32.totalorder %s63, %s77
      %p79 = scmp.eq.s32.totalorder %s32, 0
      %p80 = por %p78, %p79
      %s82 = sadd.s32 %s81, 1
      %p85 = scmp.eq.s32.totalorder %s26, 1
      %p86 = scmp.ne.s32.totalorder %s81, %s83
      %p87 = scmp.eq.s32.totalorder %s26, 0
      %p88 = por %p86, %p87
      %p89 = scmp.ne.s32.totalorder %s81, %s83
      %p90 = scmp.eq.s32.totalorder %s31, 1
      %p91 = por %p89, %p90
      %p92 = scmp.ne.s32.totalorder %s83, %s84
      %p93 = scmp.eq.s32.totalorder %s31, 0
      %p94 = por %p92, %p93
      %p95 = scmp.ne.s32.totalorder %s83, %s84
      %p96 = scmp.eq.s32.totalorder %s32, 1
      %p97 = por %p95, %p96
      %p99 = scmp.ne.s32.totalorder %s84, %s98
      %p100 = scmp.eq.s32.totalorder %s32, 0
      %p101 = por %p99, %p100
      %s103 = sadd.s32 %s102, 1
      %p106 = scmp.eq.s32.totalorder %s26, 1
      %p107 = scmp.ne.s32.totalorder %s102, %s104
      %p108 = scmp.eq.s32.totalorder %s26, 0
      %p109 = por %p107, %p108
      %p110 = scmp.ne.s32.totalorder %s102, %s104
      %p111 = scmp.eq.s32.totalorder %s31, 1
      %p112 = por %p110, %p111
      %p113 = scmp.ne.s32.totalorder %s104, %s105
      %p114 = scmp.eq.s32.totalorder %s31, 0
      %p115 = por %p113, %p114
      %p116 = scmp.ne.s32.totalorder %s104, %s105
      %p117 = scmp.eq.s32.totalorder %s32, 1
      %p118 = por %p116, %p117
      %p120 = scmp.ne.s32.totalorder %s105, %s119
      %p121 = scmp.eq.s32.totalorder %s32, 0
      %p122 = por %p120, %p121
      %s124 = sadd.s32 %s123, 1
      %p127 = scmp.eq.s32.totalorder %s26, 1
      %p128 = scmp.ne.s32.totalorder %s123, %s125
      %p129 = scmp.eq.s32.totalorder %s26, 0
      %p130 = por %p128, %p129
      %p131 = scmp.ne.s32.totalorder %s123, %s125
      %p132 = scmp.eq.s32.totalorder %s31, 1
      %p133 = por %p131, %p132
      %p134 = scmp.ne.s32.totalorder %s125, %s126
      %p135 = scmp.eq.s32.totalorder %s31, 0
      %p136 = por %p134, %p135
      %p137 = scmp.ne.s32.totalorder %s125, %s126
      %p138 = scmp.eq.s32.totalorder %s32, 1
      %p139 = por %p137, %p138
      %p141 = scmp.ne.s32.totalorder %s126, %s140
      %p142 = scmp.eq.s32.totalorder %s32, 0
      %p143 = por %p141, %p142
      %s145 = sadd.s32 %s144, 1
      %p148 = scmp.eq.s32.totalorder %s26, 1
      %p149 = scmp.ne.s32.totalorder %s144, %s146
      %p150 = scmp.eq.s32.totalorder %s26, 0
      %p151 = por %p149, %p150
      %p152 = scmp.ne.s32.totalorder %s144, %s146
      %p153 = scmp.eq.s32.totalorder %s31, 1
      %p154 = por %p152, %p153
      %p155 = scmp.ne.s32.totalorder %s146, %s147
      %p156 = scmp.eq.s32.totalorder %s31, 0
      %p157 = por %p155, %p156
      %p158 = scmp.ne.s32.totalorder %s146, %s147
      %p159 = scmp.eq.s32.totalorder %s32, 1
      %p160 = por %p158, %p159
      %p162 = scmp.ne.s32.totalorder %s147, %s161
      %p163 = scmp.eq.s32.totalorder %s32, 0
      %p164 = por %p162, %p163
      %s166 = sadd.s32 %s165, 1
      %p169 = scmp.eq.s32.totalorder %s26, 1
      %p170 = scmp.ne.s32.totalorder %s165, %s167
      %p171 = scmp.eq.s32.totalorder %s26, 0
      %p172 = por %p170, %p171
      %p173 = scmp.ne.s32.totalorder %s165, %s167
      %p174 = scmp.eq.s32.totalorder %s31, 1
      %p175 = por %p173, %p174
      %p176 = scmp.ne.s32.totalorder %s167, %s168
      %p177 = scmp.eq.s32.totalorder %s31, 0
      %p178 = por %p176, %p177
      %p179 = scmp.ne.s32.totalorder %s167, %s168
      %p180 = scmp.eq.s32.totalorder %s32, 1
      %p181 = por %p179, %p180
      %p183 = scmp.ne.s32.totalorder %s168, %s182
      %p184 = scmp.eq.s32.totalorder %s32, 0
      %p185 = por %p183, %p184
      %s187 = sadd.s32 %s186, 1
      %p190 = scmp.eq.s32.totalorder %s26, 1
      %p191 = scmp.ne.s32.totalorder %s186, %s188
      %p192 = scmp.eq.s32.totalorder %s26, 0
      %p193 = por %p191, %p192
      %p194 = scmp.ne.s32.totalorder %s186, %s188
      %p195 = scmp.eq.s32.totalorder %s31, 1
      %p196 = por %p194, %p195
      %p197 = scmp.ne.s32.totalorder %s188, %s189
      %p198 = scmp.eq.s32.totalorder %s31, 0
      %p199 = por %p197, %p198
      %p200 = scmp.ne.s32.totalorder %s188, %s189
      %p201 = scmp.eq.s32.totalorder %s32, 1
      %p202 = por %p200, %p201
      %p204 = scmp.ne.s32.totalorder %s189, %s203
      %p205 = scmp.eq.s32.totalorder %s32, 0
      %p206 = por %p204, %p205
      %s208 = sadd.s32 %s207, 1
      %p211 = scmp.eq.s32.totalorder %s26, 1
      %p212 = scmp.ne.s32.totalorder %s207, %s209
      %p213 = scmp.eq.s32.totalorder %s26, 0
      %p214 = por %p212, %p213
      %p215 = scmp.ne.s32.totalorder %s207, %s209
      %p216 = scmp.eq.s32.totalorder %s31, 1
      %p217 = por %p215, %p216
      %p218 = scmp.ne.s32.totalorder %s209, %s210
      %p219 = scmp.eq.s32.totalorder %s31, 0
      %p220 = por %p218, %p219
      %p221 = scmp.ne.s32.totalorder %s209, %s210
      %p222 = scmp.eq.s32.totalorder %s32, 1
      %p223 = por %p221, %p222
      %p225 = scmp.ne.s32.totalorder %s210, %s224
      %p226 = scmp.eq.s32.totalorder %s32, 0
      %p227 = por %p225, %p226
      %s229 = sadd.s32 %s228, 1
      %p232 = scmp.eq.s32.totalorder %s26, 1
      %p233 = scmp.ne.s32.totalorder %s228, %s230
      %p234 = scmp.eq.s32.totalorder %s26, 0
      %p235 = por %p233, %p234
      %p236 = scmp.ne.s32.totalorder %s228, %s230
      %p237 = scmp.eq.s32.totalorder %s31, 1
      %p238 = por %p236, %p237
      %p239 = scmp.ne.s32.totalorder %s230, %s231
      %p240 = scmp.eq.s32.totalorder %s31, 0
      %p241 = por %p239, %p240
      %p242 = scmp.ne.s32.totalorder %s230, %s231
      %p243 = scmp.eq.s32.totalorder %s32, 1
      %p244 = por %p242, %p243
      %p246 = scmp.ne.s32.totalorder %s231, %s245
      %p247 = scmp.eq.s32.totalorder %s32, 0
      %p248 = por %p246, %p247
      %s250 = sadd.s32 %s249, 1
      %p253 = scmp.eq.s32.totalorder %s26, 1
      %p254 = scmp.ne.s32.totalorder %s249, %s251
      %p255 = scmp.eq.s32.totalorder %s26, 0
      %p256 = por %p254, %p255
      %p257 = scmp.ne.s32.totalorder %s249, %s251
      %p258 = scmp.eq.s32.totalorder %s31, 1
      %p259 = por %p257, %p258
      %p260 = scmp.ne.s32.totalorder %s251, %s252
      %p261 = scmp.eq.s32.totalorder %s31, 0
      %p262 = por %p260, %p261
      %p263 = scmp.ne.s32.totalorder %s251, %s252
      %p264 = scmp.eq.s32.totalorder %s32, 1
      %p265 = por %p263, %p264
      %p267 = scmp.ne.s32.totalorder %s252, %s266
      %p268 = scmp.eq.s32.totalorder %s32, 0
      %p269 = por %p267, %p268
      %s270 = ssub.s32 %s26, %s33
      %p271 = scmp.eq.s32.totalorder %s270, 0
      %s273 = sadd.s32 %s272, 1
      %s274 = scalar_select %p271, %s272, %s273
      %p277 = pneg %p271
      %p278 = scmp.eq.s32.totalorder %s26, 1
      %p279 = por %p277, %p278
      %p280 = scmp.ne.s32.totalorder %s272, %s275
      %p281 = scmp.eq.s32.totalorder %s26, 0
      %p282 = por %p280, %p281
      %p283 = scmp.ne.s32.totalorder %s272, %s275
      %p284 = scmp.eq.s32.totalorder %s31, 1
      %p285 = por %p283, %p284
      %p286 = scmp.ne.s32.totalorder %s275, %s276
      %p287 = scmp.eq.s32.totalorder %s31, 0
      %p288 = por %p286, %p287
      %p289 = scmp.ne.s32.totalorder %s275, %s276
      %p290 = scmp.eq.s32.totalorder %s32, 1
      %p291 = por %p289, %p290
      %p293 = scmp.ne.s32.totalorder %s276, %s292
      %p294 = scmp.eq.s32.totalorder %s32, 0
      %p295 = por %p293, %p294
      %p296 = scmp.le.s32.totalorder 1, %s26
      %p297 = scmp.lt.s32.totalorder %s26, 3
      %p298 = pnand %p296, %p297
      %p299 = pneg %p298
      // Predicated region
      $region9: #{tpu_custom_call.1} parent=5 // pred_check
        _
      $region10: #{tpu_custom_call.1} parent=5 // pred_check_branch
        %301 = sbr.rel (%p298) target = $region12
      $region11: #{tpu_custom_call.1} parent=5 // pred_region
        %s302 = ssub.s32 %s26, 1
        // Predicated region
        $region13: #{tpu_custom_call.1} parent=11 // pred_check
          %p303 = pneg %p73
        $region14: #{tpu_custom_call.1} parent=11 // pred_check_branch
          %305 = sbr.rel (%p303) target = $region16
        $region15: #{tpu_custom_call.1} parent=11 // pred_region
          %s307 = ssub.s32 1024, 1024
          %308 = vsyncadd [#allocation6], %s307
          %s309 = sshll.u32 [#allocation5], 4
          %s310 = int_to_ptr.vmem [resolvable:$true] %s309
          %315 = dma.hbm_to_vmem [thread:$0]  %s1, 1024, %s310, [#allocation6], 64, 64, 4
        $region16: #{tpu_custom_call.1} parent=11 // pred_fallthru
          _
        // Predicated region
        $region17: #{tpu_custom_call.1} parent=11 // pred_check
          %p316 = pneg %p94
        $region18: #{tpu_custom_call.1} parent=11 // pred_check_branch
          %318 = sbr.rel (%p316) target = $region20
        $region19: #{tpu_custom_call.1} parent=11 // pred_region
          _
        $region20: #{tpu_custom_call.1} parent=11 // pred_fallthru
          _
        // Predicated region
        $region21: #{tpu_custom_call.1} parent=11 // pred_check
          %p319 = pneg %p115
        $region22: #{tpu_custom_call.1} parent=11 // pred_check_branch
          %321 = sbr.rel (%p319) target = $region24
        $region23: #{tpu_custom_call.1} parent=11 // pred_region
          %s323 = ssub.s32 1024, 1024
          %324 = vsyncadd [#allocation6], %s323
          %s325 = sshll.u32 [#allocation7], 4
          %s326 = int_to_ptr.vmem [resolvable:$true] %s325
          %331 = dma.hbm_to_vmem [thread:$0]  %s3, 1024, %s326, [#allocation6], 64, 64, 4
        $region24: #{tpu_custom_call.1} parent=11 // pred_fallthru
          _
        // Predicated region
        $region25: #{tpu_custom_call.1} parent=11 // pred_check
          %p332 = pneg %p136
        $region26: #{tpu_custom_call.1} parent=11 // pred_check_branch
          %334 = sbr.rel (%p332) target = $region28
        $region27: #{tpu_custom_call.1} parent=11 // pred_region
          _
        $region28: #{tpu_custom_call.1} parent=11 // pred_fallthru
          _
        // Predicated region
        $region29: #{tpu_custom_call.1} parent=11 // pred_check
          %p335 = pneg %p157
        $region30: #{tpu_custom_call.1} parent=11 // pred_check_branch
          %337 = sbr.rel (%p335) target = $region32
        $region31: #{tpu_custom_call.1} parent=11 // pred_region
          %s339 = ssub.s32 1024, 1024
          %340 = vsyncadd [#allocation9], %s339
          %s341 = sshll.u32 [#allocation8], 4
          %s342 = int_to_ptr.vmem [resolvable:$true] %s341
          %347 = dma.hbm_to_vmem [thread:$0]  %s5, 1024, %s342, [#allocation9], 64, 64, 4
        $region32: #{tpu_custom_call.1} parent=11 // pred_fallthru
          _
        // Predicated region
        $region33: #{tpu_custom_call.1} parent=11 // pred_check
          %p348 = pneg %p178
        $region34: #{tpu_custom_call.1} parent=11 // pred_check_branch
          %350 = sbr.rel (%p348) target = $region36
        $region35: #{tpu_custom_call.1} parent=11 // pred_region
          _
        $region36: #{tpu_custom_call.1} parent=11 // pred_fallthru
          _
        // Predicated region
        $region37: #{tpu_custom_call.1} parent=11 // pred_check
          %p351 = pneg %p199
        $region38: #{tpu_custom_call.1} parent=11 // pred_check_branch
          %353 = sbr.rel (%p351) target = $region40
        $region39: #{tpu_custom_call.1} parent=11 // pred_region
          %s355 = ssub.s32 1024, 1024
          %356 = vsyncadd [#allocation9], %s355
          %s357 = sshll.u32 [#allocation10], 4
          %s358 = int_to_ptr.vmem [resolvable:$true] %s357
          %363 = dma.hbm_to_vmem [thread:$0]  %s7, 1024, %s358, [#allocation9], 64, 64, 4
        $region40: #{tpu_custom_call.1} parent=11 // pred_fallthru
          _
        // Predicated region
        $region41: #{tpu_custom_call.1} parent=11 // pred_check
          %p364 = pneg %p220
        $region42: #{tpu_custom_call.1} parent=11 // pred_check_branch
          %366 = sbr.rel (%p364) target = $region44
        $region43: #{tpu_custom_call.1} parent=11 // pred_region
          _
        $region44: #{tpu_custom_call.1} parent=11 // pred_fallthru
          _
        // Predicated region
        $region45: #{tpu_custom_call.1} parent=11 // pred_check
          %p367 = pneg %p241
        $region46: #{tpu_custom_call.1} parent=11 // pred_check_branch
          %369 = sbr.rel (%p367) target = $region48
        $region47: #{tpu_custom_call.1} parent=11 // pred_region
          %s371 = ssub.s32 1024, 1024
          %372 = vsyncadd [#allocation12], %s371
          %s373 = sshll.u32 [#allocation11], 4
          %s374 = int_to_ptr.vmem [resolvable:$true] %s373
          %379 = dma.hbm_to_vmem [thread:$0]  %s9, 1024, %s374, [#allocation12], 64, 64, 4
        $region48: #{tpu_custom_call.1} parent=11 // pred_fallthru
          _
        // Predicated region
        $region49: #{tpu_custom_call.1} parent=11 // pred_check
          %p380 = pneg %p262
        $region50: #{tpu_custom_call.1} parent=11 // pred_check_branch
          %382 = sbr.rel (%p380) target = $region52
        $region51: #{tpu_custom_call.1} parent=11 // pred_region
          _
        $region52: #{tpu_custom_call.1} parent=11 // pred_fallthru
          _
      $region12: #{tpu_custom_call.1} parent=5 // pred_fallthru
        _
      %p383 = scmp.lt.s32.totalorder %s26, 2
      // Predicated region
      $region53: #{tpu_custom_call.1} parent=5 // pred_check
        %p384 = pneg %p383
      $region54: #{tpu_custom_call.1} parent=5 // pred_check_branch
        %386 = sbr.rel (%p384) target = $region56
      $region55: #{tpu_custom_call.1} parent=5 // pred_region
        // Predicated region
        $region57: #{tpu_custom_call.1} parent=55 // pred_check
          %p387 = pneg %p46
        $region58: #{tpu_custom_call.1} parent=55 // pred_check_branch
          %389 = sbr.rel (%p387) target = $region60
        $region59: #{tpu_custom_call.1} parent=55 // pred_region
          %s390 = sand.u32 %s36, 1
          %s391 = scalar_lea.sflag [#allocation3], %s390
          %s392 = sand.u32 %s36, 1
          %s393 = smul.addr %s392, 256
          %s394 = scalar_lea.vmem [#allocation2], %s393
          %s395 = smul.u32 32, %s26
          %s397 = ssub.s32 4096, 4096
          %398 = vsyncadd %s391, %s397
          %s399 = smul.addr %s395, 128
          %s400 = scalar_lea.hbm %s0, %s399
          %s401 = sshll.u32 %s394, 4
          %s402 = int_to_ptr.vmem [resolvable:$true] %s401
          %407 = dma.hbm_to_vmem [thread:$0]  %s400, 4096, %s402, %s391, 128, 128, 8
        $region60: #{tpu_custom_call.1} parent=55 // pred_fallthru
          _
      $region56: #{tpu_custom_call.1} parent=5 // pred_fallthru
        _
      %p408 = scmp.le.s32.totalorder 1, %s26
      %p409 = scmp.lt.s32.totalorder %s26, 3
      %p410 = pnand %p408, %p409
      %p411 = pneg %p410
      // Predicated region
      $region61: #{tpu_custom_call.1} parent=5 // pred_check
        _
      $region62: #{tpu_custom_call.1} parent=5 // pred_check_branch
        %413 = sbr.rel (%p410) target = $region64
      $region63: #{tpu_custom_call.1} parent=5 // pred_region
        %s414 = ssub.s32 %s26, 1
        %s415 = sand.u32 %s39, 1
        %s416 = scalar_lea.sflag [#allocation3], %s415
        %s417 = sand.u32 %s39, 1
        %s418 = smul.addr %s417, 256
        %s419 = scalar_lea.vmem [#allocation2], %s418
        // Predicated region
        $region65: #{tpu_custom_call.1} parent=63 // pred_check
          %p420 = pneg %p52
        $region66: #{tpu_custom_call.1} parent=63 // pred_check_branch
          %422 = sbr.rel (%p420) target = $region68
        $region67: #{tpu_custom_call.1} parent=63 // pred_region
          %423 = dma.done %s416, 4096
        $region68: #{tpu_custom_call.1} parent=63 // pred_fallthru
          _
        // Predicated region
        $region69: #{tpu_custom_call.1} parent=63 // pred_check
          %p424 = pneg %p73
        $region70: #{tpu_custom_call.1} parent=63 // pred_check_branch
          %426 = sbr.rel (%p424) target = $region72
        $region71: #{tpu_custom_call.1} parent=63 // pred_region
          %427 = dma.done [#allocation6], 1024
        $region72: #{tpu_custom_call.1} parent=63 // pred_fallthru
          _
        // Predicated region
        $region73: #{tpu_custom_call.1} parent=63 // pred_check
          %p428 = pneg %p115
        $region74: #{tpu_custom_call.1} parent=63 // pred_check_branch
          %430 = sbr.rel (%p428) target = $region76
        $region75: #{tpu_custom_call.1} parent=63 // pred_region
          %431 = dma.done [#allocation6], 1024
        $region76: #{tpu_custom_call.1} parent=63 // pred_fallthru
          _
        // Predicated region
        $region77: #{tpu_custom_call.1} parent=63 // pred_check
          %p432 = pneg %p157
        $region78: #{tpu_custom_call.1} parent=63 // pred_check_branch
          %434 = sbr.rel (%p432) target = $region80
        $region79: #{tpu_custom_call.1} parent=63 // pred_region
          %435 = dma.done [#allocation9], 1024
        $region80: #{tpu_custom_call.1} parent=63 // pred_fallthru
          _
        // Predicated region
        $region81: #{tpu_custom_call.1} parent=63 // pred_check
          %p436 = pneg %p199
        $region82: #{tpu_custom_call.1} parent=63 // pred_check_branch
          %438 = sbr.rel (%p436) target = $region84
        $region83: #{tpu_custom_call.1} parent=63 // pred_region
          %439 = dma.done [#allocation9], 1024
        $region84: #{tpu_custom_call.1} parent=63 // pred_fallthru
          _
        // Predicated region
        $region85: #{tpu_custom_call.1} parent=63 // pred_check
          %p440 = pneg %p241
        $region86: #{tpu_custom_call.1} parent=63 // pred_check_branch
          %442 = sbr.rel (%p440) target = $region88
        $region87: #{tpu_custom_call.1} parent=63 // pred_region
          %443 = dma.done [#allocation12], 1024
        $region88: #{tpu_custom_call.1} parent=63 // pred_fallthru
          _
        %s444 = sand.u32 %s39, 1
        %s445 = scalar_lea.sflag [#allocation3], %s444
        %s446 = sand.u32 %s39, 1
        %s447 = smul.addr %s446, 256
        %s448 = scalar_lea.vmem [#allocation2], %s447
        %p449 = pneg %p52
        %p450 = pneg %p49
        %p451 = pneg %p73
        %p452 = pneg %p70
        %p453 = pneg %p94
        %p454 = pneg %p91
        %p455 = pneg %p115
        %p456 = pneg %p112
        %p457 = pneg %p136
        %p458 = pneg %p133
        %p459 = pneg %p157
        %p460 = pneg %p154
        %p461 = pneg %p178
        %p462 = pneg %p175
        %p463 = pneg %p199
        %p464 = pneg %p196
        %p465 = pneg %p220
        %p466 = pneg %p217
        %p467 = pneg %p241
        %p468 = pneg %p238
        %p469 = pneg %p262
        %p470 = pneg %p259
        %p471 = pneg %p288
        %p472 = pneg %p285
        %s473 = sand.u32 %s275, 1
        %s474 = scalar_lea.sflag [#allocation4], %s473
        %s475 = sand.u32 %s275, 1
        %s476 = smul.addr %s475, 256
        %s477 = scalar_lea.vmem [#allocation13], %s476
        %s478 = smul.u32 32, %s31
        %s479 = smul.u32 32, %s31
        %v481 = vld [vmem:[%s419] sm:$0xff]
        %v482 = vld [vmem:[%s419 + $0x8] sm:$0xff]
        %v483 = vld [vmem:[%s419 + $0x10] sm:$0xff]
        %v484 = vld [vmem:[%s419 + $0x18] sm:$0xff]
        %v485 = vld [vmem:[%s419 + $0x20] sm:$0xff]
        %v486 = vld [vmem:[%s419 + $0x28] sm:$0xff]
        %v487 = vld [vmem:[%s419 + $0x30] sm:$0xff]
        %v488 = vld [vmem:[%s419 + $0x38] sm:$0xff]
        %v489 = vld [vmem:[%s419 + $0x40] sm:$0xff]
        %v490 = vld [vmem:[%s419 + $0x48] sm:$0xff]
        %v491 = vld [vmem:[%s419 + $0x50] sm:$0xff]
        %v492 = vld [vmem:[%s419 + $0x58] sm:$0xff]
        %v493 = vld [vmem:[%s419 + $0x60] sm:$0xff]
        %v494 = vld [vmem:[%s419 + $0x68] sm:$0xff]
        %v495 = vld [vmem:[%s419 + $0x70] sm:$0xff]
        %v496 = vld [vmem:[%s419 + $0x78] sm:$0xff]
        %v497 = vld [vmem:[%s419 + $0x80] sm:$0xff]
        %v498 = vld [vmem:[%s419 + $0x88] sm:$0xff]
        %v499 = vld [vmem:[%s419 + $0x90] sm:$0xff]
        %v500 = vld [vmem:[%s419 + $0x98] sm:$0xff]
        %v501 = vld [vmem:[%s419 + $0xa0] sm:$0xff]
        %v502 = vld [vmem:[%s419 + $0xa8] sm:$0xff]
        %v503 = vld [vmem:[%s419 + $0xb0] sm:$0xff]
        %v504 = vld [vmem:[%s419 + $0xb8] sm:$0xff]
        %v505 = vld [vmem:[%s419 + $0xc0] sm:$0xff]
        %v506 = vld [vmem:[%s419 + $0xc8] sm:$0xff]
        %v507 = vld [vmem:[%s419 + $0xd0] sm:$0xff]
        %v508 = vld [vmem:[%s419 + $0xd8] sm:$0xff]
        %v509 = vld [vmem:[%s419 + $0xe0] sm:$0xff]
        %v510 = vld [vmem:[%s419 + $0xe8] sm:$0xff]
        %v511 = vld [vmem:[%s419 + $0xf0] sm:$0xff]
        %v512 = vld [vmem:[%s419 + $0xf8] sm:$0xff]
        %v513 = vpack.c.bf16 %v482, %v481
        %v514 = vpack.c.bf16 %v484, %v483
        %v515 = vpack.c.bf16 %v486, %v485
        %v516 = vpack.c.bf16 %v488, %v487
        %v517 = vpack.c.bf16 %v490, %v489
        %v518 = vpack.c.bf16 %v492, %v491
        %v519 = vpack.c.bf16 %v494, %v493
        %v520 = vpack.c.bf16 %v496, %v495
        %v521 = vpack.c.bf16 %v498, %v497
        %v522 = vpack.c.bf16 %v500, %v499
        %v523 = vpack.c.bf16 %v502, %v501
        %v524 = vpack.c.bf16 %v504, %v503
        %v525 = vpack.c.bf16 %v506, %v505
        %v526 = vpack.c.bf16 %v508, %v507
        %v527 = vpack.c.bf16 %v510, %v509
        %v528 = vpack.c.bf16 %v512, %v511
        %v529 = vld [vmem:[#allocation5] sm:$0xf]
        %v530 = vld [vmem:[#allocation5 + $0x4] sm:$0xf]
        %v531 = vld [vmem:[#allocation5 + $0x8] sm:$0xf]
        %v532 = vld [vmem:[#allocation5 + $0xc] sm:$0xf]
        %v533 = vld [vmem:[#allocation5 + $0x10] sm:$0xf]
        %v534 = vld [vmem:[#allocation5 + $0x14] sm:$0xf]
        %v535 = vld [vmem:[#allocation5 + $0x18] sm:$0xf]
        %v536 = vld [vmem:[#allocation5 + $0x1c] sm:$0xf]
        %v537 = vld [vmem:[#allocation5 + $0x20] sm:$0xf]
        %v538 = vld [vmem:[#allocation5 + $0x24] sm:$0xf]
        %v539 = vld [vmem:[#allocation5 + $0x28] sm:$0xf]
        %v540 = vld [vmem:[#allocation5 + $0x2c] sm:$0xf]
        %v541 = vld [vmem:[#allocation5 + $0x30] sm:$0xf]
        %v542 = vld [vmem:[#allocation5 + $0x34] sm:$0xf]
        %v543 = vld [vmem:[#allocation5 + $0x38] sm:$0xf]
        %v544 = vld [vmem:[#allocation5 + $0x3c] sm:$0xf]
        %v545 = vld [vmem:[%s2] sm:$0x1]
        %v547 = vlaneseq
        %v548 = vshrl.u32 %v547, 7
        %v549 = vsub.s32 0, %v548
        %v550 = vrot.slane %v545, %v549
        %v568 = vunpack.c.l.b16 %v529
        %v569 = vunpack.c.l.b16 %v530
        %v570 = vunpack.c.l.b16 %v531
        %v571 = vunpack.c.l.b16 %v532
        %v572 = vunpack.c.l.b16 %v533
        %v573 = vunpack.c.l.b16 %v534
        %v574 = vunpack.c.l.b16 %v535
        %v575 = vunpack.c.l.b16 %v536
        %v576 = vunpack.c.l.b16 %v537
        %v577 = vunpack.c.l.b16 %v538
        %v578 = vunpack.c.l.b16 %v539
        %v579 = vunpack.c.l.b16 %v540
        %v580 = vunpack.c.l.b16 %v541
        %v581 = vunpack.c.l.b16 %v542
        %v582 = vunpack.c.l.b16 %v543
        %v583 = vunpack.c.l.b16 %v544
        %v584 = vpack.c.b16 %v569, %v568
        %v585 = vpack.c.b16 %v571, %v570
        %v586 = vpack.c.b16 %v573, %v572
        %v587 = vpack.c.b16 %v575, %v574
        %v588 = vpack.c.b16 %v577, %v576
        %v589 = vpack.c.b16 %v579, %v578
        %v590 = vpack.c.b16 %v581, %v580
        %v591 = vpack.c.b16 %v583, %v582
        %600 = vmatprep.subr.bf16.mxu0 0
        %601 = vmatpush1.bf16.msra.mxu0 %v584
        %602 = vmatprep.subr.bf16.mxu0 0
        %603 = vmatpush1.bf16.msra.mxu0 %v585
        %604 = vmatprep.subr.bf16.mxu0 0
        %605 = vmatpush1.bf16.msra.mxu0 %v586
        %606 = vmatprep.subr.bf16.mxu0 0
        %607 = vmatpush1.bf16.msra.mxu0 %v587
        %608 = vmatprep.subr.bf16.mxu0 0
        %609 = vmatpush1.bf16.msra.mxu0 %v588
        %610 = vmatprep.subr.bf16.mxu0 0
        %611 = vmatpush1.bf16.msra.mxu0 %v589
        %612 = vmatprep.subr.bf16.mxu0 0
        %613 = vmatpush1.bf16.msra.mxu0 %v590
        %614 = vmatprep.subr.bf16.mxu0 0
        %615 = vmatpush1.bf16.msra.mxu0 %v591
        %616 = vmatprep.subr.bf16.mxu0 0
        %617 = vmatpush1.bf16.msra.mxu0 0
        %618 = vmatprep.subr.bf16.mxu0 0
        %619 = vmatpush1.bf16.msra.mxu0 0
        %620 = vmatprep.subr.bf16.mxu0 0
        %621 = vmatpush1.bf16.msra.mxu0 0
        %622 = vmatprep.subr.bf16.mxu0 0
        %623 = vmatpush1.bf16.msra.mxu0 0
        %624 = vmatprep.subr.bf16.mxu0 0
        %625 = vmatpush1.bf16.msra.mxu0 0
        %626 = vmatprep.subr.bf16.mxu0 0
        %627 = vmatpush1.bf16.msra.mxu0 0
        %628 = vmatprep.subr.bf16.mxu0 0
        %629 = vmatpush1.bf16.msra.mxu0 0
        %630 = vmatprep.subr.bf16.mxu0 0
        %631 = vmatpush1.bf16.msra.mxu0 0
        %632 = vmatprep.mubr.bf16.mxu0 0
        %633 = vmatmul.mubr.bf16.gmra.mrb[0].mxu0 %v513
        %v634 = vpop.f32.mrb[0].mxu0
        %v635 = vadd.f32 %v550, %v634
        %v636 = vpop.f32.mrb[0].mxu0
        %v637 = vpop.f32.mrb[0].mxu0
        %v638 = vadd.f32 %v550, %v637
        %v639 = vpop.f32.mrb[0].mxu0
        %640 = vmatprep.mubr.bf16.mxu0 0
        %641 = vmatmul.mubr.bf16.gmra.mrb[0].mxu0 %v514
        %v642 = vpop.f32.mrb[0].mxu0
        %v643 = vadd.f32 %v550, %v642
        %v644 = vpop.f32.mrb[0].mxu0
        %v645 = vpop.f32.mrb[0].mxu0
        %v646 = vadd.f32 %v550, %v645
        %v647 = vpop.f32.mrb[0].mxu0
        %648 = vmatprep.mubr.bf16.mxu0 0
        %649 = vmatmul.mubr.bf16.gmra.mrb[0].mxu0 %v515
        %v650 = vpop.f32.mrb[0].mxu0
        %v651 = vadd.f32 %v550, %v650
        %v652 = vpop.f32.mrb[0].mxu0
        %v653 = vpop.f32.mrb[0].mxu0
        %v654 = vadd.f32 %v550, %v653
        %v655 = vpop.f32.mrb[0].mxu0
        %656 = vmatprep.mubr.bf16.mxu0 0
        %657 = vmatmul.mubr.bf16.gmra.mrb[0].mxu0 %v516
        %v658 = vpop.f32.mrb[0].mxu0
        %v659 = vadd.f32 %v550, %v658
        %v660 = vpop.f32.mrb[0].mxu0
        %v661 = vpop.f32.mrb[0].mxu0
        %v662 = vadd.f32 %v550, %v661
        %v663 = vpop.f32.mrb[0].mxu0
        %664 = vmatprep.mubr.bf16.mxu0 0
        %665 = vmatmul.mubr.bf16.gmra.mrb[0].mxu0 %v517
        %v666 = vpop.f32.mrb[0].mxu0
        %v667 = vadd.f32 %v550, %v666
        %v668 = vpop.f32.mrb[0].mxu0
        %v669 = vpop.f32.mrb[0].mxu0
        %v670 = vadd.f32 %v550, %v669
        %v671 = vpop.f32.mrb[0].mxu0
        %672 = vmatprep.mubr.bf16.mxu0 0
        %673 = vmatmul.mubr.bf16.gmra.mrb[0].mxu0 %v518
        %v674 = vpop.f32.mrb[0].mxu0
        %v675 = vadd.f32 %v550, %v674
        %v676 = vpop.f32.mrb[0].mxu0
        %v677 = vpop.f32.mrb[0].mxu0
        %v678 = vadd.f32 %v550, %v677
        %v679 = vpop.f32.mrb[0].mxu0
        %680 = vmatprep.mubr.bf16.mxu0 0
        %681 = vmatmul.mubr.bf16.gmra.mrb[0].mxu0 %v519
        %v682 = vpop.f32.mrb[0].mxu0
        %v683 = vadd.f32 %v550, %v682
        %v684 = vpop.f32.mrb[0].mxu0
        %v685 = vpop.f32.mrb[0].mxu0
        %v686 = vadd.f32 %v550, %v685
        %v687 = vpop.f32.mrb[0].mxu0
        %688 = vmatprep.mubr.bf16.mxu0 0
        %689 = vmatmul.mubr.bf16.gmra.mrb[0].mxu0 %v520
        %v690 = vpop.f32.mrb[0].mxu0
        %v691 = vadd.f32 %v550, %v690
        %v692 = vpop.f32.mrb[0].mxu0
        %v693 = vpop.f32.mrb[0].mxu0
        %v694 = vadd.f32 %v550, %v693
        %v695 = vpop.f32.mrb[0].mxu0
        %696 = vmatprep.mubr.bf16.mxu0 0
        %697 = vmatmul.mubr.bf16.gmra.mrb[0].mxu0 %v521
        %v698 = vpop.f32.mrb[0].mxu0
        %v699 = vadd.f32 %v550, %v698
        %v700 = vpop.f32.mrb[0].mxu0
        %v701 = vpop.f32.mrb[0].mxu0
        %v702 = vadd.f32 %v550, %v701
        %v703 = vpop.f32.mrb[0].mxu0
        %704 = vmatprep.mubr.bf16.mxu0 0
        %705 = vmatmul.mubr.bf16.gmra.mrb[0].mxu0 %v522
        %v706 = vpop.f32.mrb[0].mxu0
        %v707 = vadd.f32 %v550, %v706
        %v708 = vpop.f32.mrb[0].mxu0
        %v709 = vpop.f32.mrb[0].mxu0
        %v710 = vadd.f32 %v550, %v709
        %v711 = vpop.f32.mrb[0].mxu0
        %712 = vmatprep.mubr.bf16.mxu0 0
        %713 = vmatmul.mubr.bf16.gmra.mrb[0].mxu0 %v523
        %v714 = vpop.f32.mrb[0].mxu0
        %v715 = vadd.f32 %v550, %v714
        %v716 = vpop.f32.mrb[0].mxu0
        %v717 = vpop.f32.mrb[0].mxu0
        %v718 = vadd.f32 %v550, %v717
        %v719 = vpop.f32.mrb[0].mxu0
        %720 = vmatprep.mubr.bf16.mxu0 0
        %721 = vmatmul.mubr.bf16.gmra.mrb[0].mxu0 %v524
        %v722 = vpop.f32.mrb[0].mxu0
        %v723 = vadd.f32 %v550, %v722
        %v724 = vpop.f32.mrb[0].mxu0
        %v725 = vpop.f32.mrb[0].mxu0
        %v726 = vadd.f32 %v550, %v725
        %v727 = vpop.f32.mrb[0].mxu0
        %728 = vmatprep.mubr.bf16.mxu0 0
        %729 = vmatmul.mubr.bf16.gmra.mrb[0].mxu0 %v525
        %v730 = vpop.f32.mrb[0].mxu0
        %v731 = vadd.f32 %v550, %v730
        %v732 = vpop.f32.mrb[0].mxu0
        %v733 = vpop.f32.mrb[0].mxu0
        %v734 = vadd.f32 %v550, %v733
        %v735 = vpop.f32.mrb[0].mxu0
        %736 = vmatprep.mubr.bf16.mxu0 0
        %737 = vmatmul.mubr.bf16.gmra.mrb[0].mxu0 %v526
        %v738 = vpop.f32.mrb[0].mxu0
        %v739 = vadd.f32 %v550, %v738
        %v740 = vpop.f32.mrb[0].mxu0
        %v741 = vpop.f32.mrb[0].mxu0
        %v742 = vadd.f32 %v550, %v741
        %v743 = vpop.f32.mrb[0].mxu0
        %744 = vmatprep.mubr.bf16.mxu0 0
        %745 = vmatmul.mubr.bf16.gmra.mrb[0].mxu0 %v527
        %v746 = vpop.f32.mrb[0].mxu0
        %v747 = vadd.f32 %v550, %v746
        %v748 = vpop.f32.mrb[0].mxu0
        %v749 = vpop.f32.mrb[0].mxu0
        %v750 = vadd.f32 %v550, %v749
        %v751 = vpop.f32.mrb[0].mxu0
        %752 = vmatprep.mubr.bf16.mxu0 0
        %753 = vmatmul.mubr.bf16.gmra.mrb[0].mxu0 %v528
        %v754 = vpop.f32.mrb[0].mxu0
        %v755 = vadd.f32 %v550, %v754
        %v756 = vpop.f32.mrb[0].mxu0
        %v757 = vpop.f32.mrb[0].mxu0
        %v758 = vadd.f32 %v550, %v757
        %v759 = vpop.f32.mrb[0].mxu0
        %760 = vdwg.mxu0
        %v761 = vtanh.pop %v635
        %v762 = vtanh.pop %v638
        %v763 = vtanh.pop %v643
        %v764 = vtanh.pop %v646
        %v765 = vtanh.pop %v651
        %v766 = vtanh.pop %v654
        %v767 = vtanh.pop %v659
        %v768 = vtanh.pop %v662
        %v769 = vtanh.pop %v667
        %v770 = vtanh.pop %v670
        %v771 = vtanh.pop %v675
        %v772 = vtanh.pop %v678
        %v773 = vtanh.pop %v683
        %v774 = vtanh.pop %v686
        %v775 = vtanh.pop %v691
        %v776 = vtanh.pop %v694
        %v777 = vtanh.pop %v699
        %v778 = vtanh.pop %v702
        %v779 = vtanh.pop %v707
        %v780 = vtanh.pop %v710
        %v781 = vtanh.pop %v715
        %v782 = vtanh.pop %v718
        %v783 = vtanh.pop %v723
        %v784 = vtanh.pop %v726
        %v785 = vtanh.pop %v731
        %v786 = vtanh.pop %v734
        %v787 = vtanh.pop %v739
        %v788 = vtanh.pop %v742
        %v789 = vtanh.pop %v747
        %v790 = vtanh.pop %v750
        %v791 = vtanh.pop %v755
        %v792 = vtanh.pop %v758
        %v793 = vpack.c.bf16 %v762, %v761
        %v794 = vpack.c.bf16 %v764, %v763
        %v795 = vpack.c.bf16 %v766, %v765
        %v796 = vpack.c.bf16 %v768, %v767
        %v797 = vpack.c.bf16 %v770, %v769
        %v798 = vpack.c.bf16 %v772, %v771
        %v799 = vpack.c.bf16 %v774, %v773
        %v800 = vpack.c.bf16 %v776, %v775
        %v801 = vpack.c.bf16 %v778, %v777
        %v802 = vpack.c.bf16 %v780, %v779
        %v803 = vpack.c.bf16 %v782, %v781
        %v804 = vpack.c.bf16 %v784, %v783
        %v805 = vpack.c.bf16 %v786, %v785
        %v806 = vpack.c.bf16 %v788, %v787
        %v807 = vpack.c.bf16 %v790, %v789
        %v808 = vpack.c.bf16 %v792, %v791
        %v809 = vld [vmem:[#allocation7] sm:$0xf]
        %v810 = vld [vmem:[#allocation7 + $0x4] sm:$0xf]
        %v811 = vld [vmem:[#allocation7 + $0x8] sm:$0xf]
        %v812 = vld [vmem:[#allocation7 + $0xc] sm:$0xf]
        %v813 = vld [vmem:[#allocation7 + $0x10] sm:$0xf]
        %v814 = vld [vmem:[#allocation7 + $0x14] sm:$0xf]
        %v815 = vld [vmem:[#allocation7 + $0x18] sm:$0xf]
        %v816 = vld [vmem:[#allocation7 + $0x1c] sm:$0xf]
        %v817 = vld [vmem:[#allocation7 + $0x20] sm:$0xf]
        %v818 = vld [vmem:[#allocation7 + $0x24] sm:$0xf]
        %v819 = vld [vmem:[#allocation7 + $0x28] sm:$0xf]
        %v820 = vld [vmem:[#allocation7 + $0x2c] sm:$0xf]
        %v821 = vld [vmem:[#allocation7 + $0x30] sm:$0xf]
        %v822 = vld [vmem:[#allocation7 + $0x34] sm:$0xf]
        %v823 = vld [vmem:[#allocation7 + $0x38] sm:$0xf]
        %v824 = vld [vmem:[#allocation7 + $0x3c] sm:$0xf]
        %v825 = vld [vmem:[%s4] sm:$0x1]
        %v827 = vlaneseq
        %v828 = vshrl.u32 %v827, 7
        %v829 = vsub.s32 0, %v828
        %v830 = vrot.slane %v825, %v829
        %v848 = vunpack.c.l.b16 %v809
        %v849 = vunpack.c.l.b16 %v810
        %v850 = vunpack.c.l.b16 %v811
        %v851 = vunpack.c.l.b16 %v812
        %v852 = vunpack.c.l.b16 %v813
        %v853 = vunpack.c.l.b16 %v814
        %v854 = vunpack.c.l.b16 %v815
        %v855 = vunpack.c.l.b16 %v816
        %v856 = vunpack.c.l.b16 %v817
        %v857 = vunpack.c.l.b16 %v818
        %v858 = vunpack.c.l.b16 %v819
        %v859 = vunpack.c.l.b16 %v820
        %v860 = vunpack.c.l.b16 %v821
        %v861 = vunpack.c.l.b16 %v822
        %v862 = vunpack.c.l.b16 %v823
        %v863 = vunpack.c.l.b16 %v824
        %v864 = vpack.c.b16 %v849, %v848
        %v865 = vpack.c.b16 %v851, %v850
        %v866 = vpack.c.b16 %v853, %v852
        %v867 = vpack.c.b16 %v855, %v854
        %v868 = vpack.c.b16 %v857, %v856
        %v869 = vpack.c.b16 %v859, %v858
        %v870 = vpack.c.b16 %v861, %v860
        %v871 = vpack.c.b16 %v863, %v862
        %880 = vmatprep.subr.bf16.mxu0 0
        %881 = vmatpush1.bf16.msra.mxu0 %v864
        %882 = vmatprep.subr.bf16.mxu0 0
        %883 = vmatpush1.bf16.msra.mxu0 %v865
        %884 = vmatprep.subr.bf16.mxu0 0
        %885 = vmatpush1.bf16.msra.mxu0 %v866
        %886 = vmatprep.subr.bf16.mxu0 0
        %887 = vmatpush1.bf16.msra.mxu0 %v867
        %888 = vmatprep.subr.bf16.mxu0 0
        %889 = vmatpush1.bf16.msra.mxu0 %v868
        %890 = vmatprep.subr.bf16.mxu0 0
        %891 = vmatpush1.bf16.msra.mxu0 %v869
        %892 = vmatprep.subr.bf16.mxu0 0
        %893 = vmatpush1.bf16.msra.mxu0 %v870
        %894 = vmatprep.subr.bf16.mxu0 0
        %895 = vmatpush1.bf16.msra.mxu0 %v871
        %896 = vmatprep.subr.bf16.mxu0 0
        %897 = vmatpush1.bf16.msra.mxu0 0
        %898 = vmatprep.subr.bf16.mxu0 0
        %899 = vmatpush1.bf16.msra.mxu0 0
        %900 = vmatprep.subr.bf16.mxu0 0
        %901 = vmatpush1.bf16.msra.mxu0 0
        %902 = vmatprep.subr.bf16.mxu0 0
        %903 = vmatpush1.bf16.msra.mxu0 0
        %904 = vmatprep.subr.bf16.mxu0 0
        %905 = vmatpush1.bf16.msra.mxu0 0
        %906 = vmatprep.subr.bf16.mxu0 0
        %907 = vmatpush1.bf16.msra.mxu0 0
        %908 = vmatprep.subr.bf16.mxu0 0
        %909 = vmatpush1.bf16.msra.mxu0 0
        %910 = vmatprep.subr.bf16.mxu0 0
        %911 = vmatpush1.bf16.msra.mxu0 0
        %912 = vmatprep.mubr.bf16.mxu0 0
        %913 = vmatmul.mubr.bf16.gmra.mrb[0].mxu0 %v793
        %v914 = vpop.f32.mrb[0].mxu0
        %v915 = vadd.f32 %v830, %v914
        %v916 = vpop.f32.mrb[0].mxu0
        %v917 = vpop.f32.mrb[0].mxu0
        %v918 = vadd.f32 %v830, %v917
        %v919 = vpop.f32.mrb[0].mxu0
        %920 = vmatprep.mubr.bf16.mxu0 0
        %921 = vmatmul.mubr.bf16.gmra.mrb[0].mxu0 %v794
        %v922 = vpop.f32.mrb[0].mxu0
        %v923 = vadd.f32 %v830, %v922
        %v924 = vpop.f32.mrb[0].mxu0
        %v925 = vpop.f32.mrb[0].mxu0
        %v926 = vadd.f32 %v830, %v925
        %v927 = vpop.f32.mrb[0].mxu0
        %928 = vmatprep.mubr.bf16.mxu0 0
        %929 = vmatmul.mubr.bf16.gmra.mrb[0].mxu0 %v795
        %v930 = vpop.f32.mrb[0].mxu0
        %v931 = vadd.f32 %v830, %v930
        %v932 = vpop.f32.mrb[0].mxu0
        %v933 = vpop.f32.mrb[0].mxu0
        %v934 = vadd.f32 %v830, %v933
        %v935 = vpop.f32.mrb[0].mxu0
        %936 = vmatprep.mubr.bf16.mxu0 0
        %937 = vmatmul.mubr.bf16.gmra.mrb[0].mxu0 %v796
        %v938 = vpop.f32.mrb[0].mxu0
        %v939 = vadd.f32 %v830, %v938
        %v940 = vpop.f32.mrb[0].mxu0
        %v941 = vpop.f32.mrb[0].mxu0
        %v942 = vadd.f32 %v830, %v941
        %v943 = vpop.f32.mrb[0].mxu0
        %944 = vmatprep.mubr.bf16.mxu0 0
        %945 = vmatmul.mubr.bf16.gmra.mrb[0].mxu0 %v797
        %v946 = vpop.f32.mrb[0].mxu0
        %v947 = vadd.f32 %v830, %v946
        %v948 = vpop.f32.mrb[0].mxu0
        %v949 = vpop.f32.mrb[0].mxu0
        %v950 = vadd.f32 %v830, %v949
        %v951 = vpop.f32.mrb[0].mxu0
        %952 = vmatprep.mubr.bf16.mxu0 0
        %953 = vmatmul.mubr.bf16.gmra.mrb[0].mxu0 %v798
        %v954 = vpop.f32.mrb[0].mxu0
        %v955 = vadd.f32 %v830, %v954
        %v956 = vpop.f32.mrb[0].mxu0
        %v957 = vpop.f32.mrb[0].mxu0
        %v958 = vadd.f32 %v830, %v957
        %v959 = vpop.f32.mrb[0].mxu0
        %960 = vmatprep.mubr.bf16.mxu0 0
        %961 = vmatmul.mubr.bf16.gmra.mrb[0].mxu0 %v799
        %v962 = vpop.f32.mrb[0].mxu0
        %v963 = vadd.f32 %v830, %v962
        %v964 = vpop.f32.mrb[0].mxu0
        %v965 = vpop.f32.mrb[0].mxu0
        %v966 = vadd.f32 %v830, %v965
        %v967 = vpop.f32.mrb[0].mxu0
        %968 = vmatprep.mubr.bf16.mxu0 0
        %969 = vmatmul.mubr.bf16.gmra.mrb[0].mxu0 %v800
        %v970 = vpop.f32.mrb[0].mxu0
        %v971 = vadd.f32 %v830, %v970
        %v972 = vpop.f32.mrb[0].mxu0
        %v973 = vpop.f32.mrb[0].mxu0
        %v974 = vadd.f32 %v830, %v973
        %v975 = vpop.f32.mrb[0].mxu0
        %976 = vmatprep.mubr.bf16.mxu0 0
        %977 = vmatmul.mubr.bf16.gmra.mrb[0].mxu0 %v801
        %v978 = vpop.f32.mrb[0].mxu0
        %v979 = vadd.f32 %v830, %v978
        %v980 = vpop.f32.mrb[0].mxu0
        %v981 = vpop.f32.mrb[0].mxu0
        %v982 = vadd.f32 %v830, %v981
        %v983 = vpop.f32.mrb[0].mxu0
        %984 = vmatprep.mubr.bf16.mxu0 0
        %985 = vmatmul.mubr.bf16.gmra.mrb[0].mxu0 %v802
        %v986 = vpop.f32.mrb[0].mxu0
        %v987 = vadd.f32 %v830, %v986
        %v988 = vpop.f32.mrb[0].mxu0
        %v989 = vpop.f32.mrb[0].mxu0
        %v990 = vadd.f32 %v830, %v989
        %v991 = vpop.f32.mrb[0].mxu0
        %992 = vmatprep.mubr.bf16.mxu0 0
        %993 = vmatmul.mubr.bf16.gmra.mrb[0].mxu0 %v803
        %v994 = vpop.f32.mrb[0].mxu0
        %v995 = vadd.f32 %v830, %v994
        %v996 = vpop.f32.mrb[0].mxu0
        %v997 = vpop.f32.mrb[0].mxu0
        %v998 = vadd.f32 %v830, %v997
        %v999 = vpop.f32.mrb[0].mxu0
        %1000 = vmatprep.mubr.bf16.mxu0 0
        %1001 = vmatmul.mubr.bf16.gmra.mrb[0].mxu0 %v804
        %v1002 = vpop.f32.mrb[0].mxu0
        %v1003 = vadd.f32 %v830, %v1002
        %v1004 = vpop.f32.mrb[0].mxu0
        %v1005 = vpop.f32.mrb[0].mxu0
        %v1006 = vadd.f32 %v830, %v1005
        %v1007 = vpop.f32.mrb[0].mxu0
        %1008 = vmatprep.mubr.bf16.mxu0 0
        %1009 = vmatmul.mubr.bf16.gmra.mrb[0].mxu0 %v805
        %v1010 = vpop.f32.mrb[0].mxu0
        %v1011 = vadd.f32 %v830, %v1010
        %v1012 = vpop.f32.mrb[0].mxu0
        %v1013 = vpop.f32.mrb[0].mxu0
        %v1014 = vadd.f32 %v830, %v1013
        %v1015 = vpop.f32.mrb[0].mxu0
        %1016 = vmatprep.mubr.bf16.mxu0 0
        %1017 = vmatmul.mubr.bf16.gmra.mrb[0].mxu0 %v806
        %v1018 = vpop.f32.mrb[0].mxu0
        %v1019 = vadd.f32 %v830, %v1018
        %v1020 = vpop.f32.mrb[0].mxu0
        %v1021 = vpop.f32.mrb[0].mxu0
        %v1022 = vadd.f32 %v830, %v1021
        %v1023 = vpop.f32.mrb[0].mxu0
        %1024 = vmatprep.mubr.bf16.mxu0 0
        %1025 = vmatmul.mubr.bf16.gmra.mrb[0].mxu0 %v807
        %v1026 = vpop.f32.mrb[0].mxu0
        %v1027 = vadd.f32 %v830, %v1026
        %v1028 = vpop.f32.mrb[0].mxu0
        %v1029 = vpop.f32.mrb[0].mxu0
        %v1030 = vadd.f32 %v830, %v1029
        %v1031 = vpop.f32.mrb[0].mxu0
        %1032 = vmatprep.mubr.bf16.mxu0 0
        %1033 = vmatmul.mubr.bf16.gmra.mrb[0].mxu0 %v808
        %v1034 = vpop.f32.mrb[0].mxu0
        %v1035 = vadd.f32 %v830, %v1034
        %v1036 = vpop.f32.mrb[0].mxu0
        %v1037 = vpop.f32.mrb[0].mxu0
        %v1038 = vadd.f32 %v830, %v1037
        %v1039 = vpop.f32.mrb[0].mxu0
        %1040 = vdwg.mxu0
        %v1041 = vtanh.pop %v915
        %v1042 = vtanh.pop %v918
        %v1043 = vtanh.pop %v923
        %v1044 = vtanh.pop %v926
        %v1045 = vtanh.pop %v931
        %v1046 = vtanh.pop %v934
        %v1047 = vtanh.pop %v939
        %v1048 = vtanh.pop %v942
        %v1049 = vtanh.pop %v947
        %v1050 = vtanh.pop %v950
        %v1051 = vtanh.pop %v955
        %v1052 = vtanh.pop %v958
        %v1053 = vtanh.pop %v963
        %v1054 = vtanh.pop %v966
        %v1055 = vtanh.pop %v971
        %v1056 = vtanh.pop %v974
        %v1057 = vtanh.pop %v979
        %v1058 = vtanh.pop %v982
        %v1059 = vtanh.pop %v987
        %v1060 = vtanh.pop %v990
        %v1061 = vtanh.pop %v995
        %v1062 = vtanh.pop %v998
        %v1063 = vtanh.pop %v1003
        %v1064 = vtanh.pop %v1006
        %v1065 = vtanh.pop %v1011
        %v1066 = vtanh.pop %v1014
        %v1067 = vtanh.pop %v1019
        %v1068 = vtanh.pop %v1022
        %v1069 = vtanh.pop %v1027
        %v1070 = vtanh.pop %v1030
        %v1071 = vtanh.pop %v1035
        %v1072 = vtanh.pop %v1038
        %v1073 = vpack.c.bf16 %v1042, %v1041
        %v1074 = vpack.c.bf16 %v1044, %v1043
        %v1075 = vpack.c.bf16 %v1046, %v1045
        %v1076 = vpack.c.bf16 %v1048, %v1047
        %v1077 = vpack.c.bf16 %v1050, %v1049
        %v1078 = vpack.c.bf16 %v1052, %v1051
        %v1079 = vpack.c.bf16 %v1054, %v1053
        %v1080 = vpack.c.bf16 %v1056, %v1055
        %v1081 = vpack.c.bf16 %v1058, %v1057
        %v1082 = vpack.c.bf16 %v1060, %v1059
        %v1083 = vpack.c.bf16 %v1062, %v1061
        %v1084 = vpack.c.bf16 %v1064, %v1063
        %v1085 = vpack.c.bf16 %v1066, %v1065
        %v1086 = vpack.c.bf16 %v1068, %v1067
        %v1087 = vpack.c.bf16 %v1070, %v1069
        %v1088 = vpack.c.bf16 %v1072, %v1071
        %v1089 = vld [vmem:[#allocation8] sm:$0xf]
        %v1090 = vld [vmem:[#allocation8 + $0x4] sm:$0xf]
        %v1091 = vld [vmem:[#allocation8 + $0x8] sm:$0xf]
        %v1092 = vld [vmem:[#allocation8 + $0xc] sm:$0xf]
        %v1093 = vld [vmem:[#allocation8 + $0x10] sm:$0xf]
        %v1094 = vld [vmem:[#allocation8 + $0x14] sm:$0xf]
        %v1095 = vld [vmem:[#allocation8 + $0x18] sm:$0xf]
        %v1096 = vld [vmem:[#allocation8 + $0x1c] sm:$0xf]
        %v1097 = vld [vmem:[#allocation8 + $0x20] sm:$0xf]
        %v1098 = vld [vmem:[#allocation8 + $0x24] sm:$0xf]
        %v1099 = vld [vmem:[#allocation8 + $0x28] sm:$0xf]
        %v1100 = vld [vmem:[#allocation8 + $0x2c] sm:$0xf]
        %v1101 = vld [vmem:[#allocation8 + $0x30] sm:$0xf]
        %v1102 = vld [vmem:[#allocation8 + $0x34] sm:$0xf]
        %v1103 = vld [vmem:[#allocation8 + $0x38] sm:$0xf]
        %v1104 = vld [vmem:[#allocation8 + $0x3c] sm:$0xf]
        %v1105 = vld [vmem:[%s6] sm:$0x1]
        %v1107 = vlaneseq
        %v1108 = vshrl.u32 %v1107, 7
        %v1109 = vsub.s32 0, %v1108
        %v1110 = vrot.slane %v1105, %v1109
        %v1128 = vunpack.c.l.b16 %v1089
        %v1129 = vunpack.c.l.b16 %v1090
        %v1130 = vunpack.c.l.b16 %v1091
        %v1131 = vunpack.c.l.b16 %v1092
        %v1132 = vunpack.c.l.b16 %v1093
        %v1133 = vunpack.c.l.b16 %v1094
        %v1134 = vunpack.c.l.b16 %v1095
        %v1135 = vunpack.c.l.b16 %v1096
        %v1136 = vunpack.c.l.b16 %v1097
        %v1137 = vunpack.c.l.b16 %v1098
        %v1138 = vunpack.c.l.b16 %v1099
        %v1139 = vunpack.c.l.b16 %v1100
        %v1140 = vunpack.c.l.b16 %v1101
        %v1141 = vunpack.c.l.b16 %v1102
        %v1142 = vunpack.c.l.b16 %v1103
        %v1143 = vunpack.c.l.b16 %v1104
        %v1144 = vpack.c.b16 %v1129, %v1128
        %v1145 = vpack.c.b16 %v1131, %v1130
        %v1146 = vpack.c.b16 %v1133, %v1132
        %v1147 = vpack.c.b16 %v1135, %v1134
        %v1148 = vpack.c.b16 %v1137, %v1136
        %v1149 = vpack.c.b16 %v1139, %v1138
        %v1150 = vpack.c.b16 %v1141, %v1140
        %v1151 = vpack.c.b16 %v1143, %v1142
        %1160 = vmatprep.subr.bf16.mxu0 0
        %1161 = vmatpush1.bf16.msra.mxu0 %v1144
        %1162 = vmatprep.subr.bf16.mxu0 0
        %1163 = vmatpush1.bf16.msra.mxu0 %v1145
        %1164 = vmatprep.subr.bf16.mxu0 0
        %1165 = vmatpush1.bf16.msra.mxu0 %v1146
        %1166 = vmatprep.subr.bf16.mxu0 0
        %1167 = vmatpush1.bf16.msra.mxu0 %v1147
        %1168 = vmatprep.subr.bf16.mxu0 0
        %1169 = vmatpush1.bf16.msra.mxu0 %v1148
        %1170 = vmatprep.subr.bf16.mxu0 0
        %1171 = vmatpush1.bf16.msra.mxu0 %v1149
        %1172 = vmatprep.subr.bf16.mxu0 0
        %1173 = vmatpush1.bf16.msra.mxu0 %v1150
        %1174 = vmatprep.subr.bf16.mxu0 0
        %1175 = vmatpush1.bf16.msra.mxu0 %v1151
        %1176 = vmatprep.subr.bf16.mxu0 0
        %1177 = vmatpush1.bf16.msra.mxu0 0
        %1178 = vmatprep.subr.bf16.mxu0 0
        %1179 = vmatpush1.bf16.msra.mxu0 0
        %1180 = vmatprep.subr.bf16.mxu0 0
        %1181 = vmatpush1.bf16.msra.mxu0 0
        %1182 = vmatprep.subr.bf16.mxu0 0
        %1183 = vmatpush1.bf16.msra.mxu0 0
        %1184 = vmatprep.subr.bf16.mxu0 0
        %1185 = vmatpush1.bf16.msra.mxu0 0
        %1186 = vmatprep.subr.bf16.mxu0 0
        %1187 = vmatpush1.bf16.msra.mxu0 0
        %1188 = vmatprep.subr.bf16.mxu0 0
        %1189 = vmatpush1.bf16.msra.mxu0 0
        %1190 = vmatprep.subr.bf16.mxu0 0
        %1191 = vmatpush1.bf16.msra.mxu0 0
        %1192 = vmatprep.mubr.bf16.mxu0 0
        %1193 = vmatmul.mubr.bf16.gmra.mrb[0].mxu0 %v1073
        %v1194 = vpop.f32.mrb[0].mxu0
        %v1195 = vadd.f32 %v1110, %v1194
        %v1196 = vpop.f32.mrb[0].mxu0
        %v1197 = vpop.f32.mrb[0].mxu0
        %v1198 = vadd.f32 %v1110, %v1197
        %v1199 = vpop.f32.mrb[0].mxu0
        %1200 = vmatprep.mubr.bf16.mxu0 0
        %1201 = vmatmul.mubr.bf16.gmra.mrb[0].mxu0 %v1074
        %v1202 = vpop.f32.mrb[0].mxu0
        %v1203 = vadd.f32 %v1110, %v1202
        %v1204 = vpop.f32.mrb[0].mxu0
        %v1205 = vpop.f32.mrb[0].mxu0
        %v1206 = vadd.f32 %v1110, %v1205
        %v1207 = vpop.f32.mrb[0].mxu0
        %1208 = vmatprep.mubr.bf16.mxu0 0
        %1209 = vmatmul.mubr.bf16.gmra.mrb[0].mxu0 %v1075
        %v1210 = vpop.f32.mrb[0].mxu0
        %v1211 = vadd.f32 %v1110, %v1210
        %v1212 = vpop.f32.mrb[0].mxu0
        %v1213 = vpop.f32.mrb[0].mxu0
        %v1214 = vadd.f32 %v1110, %v1213
        %v1215 = vpop.f32.mrb[0].mxu0
        %1216 = vmatprep.mubr.bf16.mxu0 0
        %1217 = vmatmul.mubr.bf16.gmra.mrb[0].mxu0 %v1076
        %v1218 = vpop.f32.mrb[0].mxu0
        %v1219 = vadd.f32 %v1110, %v1218
        %v1220 = vpop.f32.mrb[0].mxu0
        %v1221 = vpop.f32.mrb[0].mxu0
        %v1222 = vadd.f32 %v1110, %v1221
        %v1223 = vpop.f32.mrb[0].mxu0
        %1224 = vmatprep.mubr.bf16.mxu0 0
        %1225 = vmatmul.mubr.bf16.gmra.mrb[0].mxu0 %v1077
        %v1226 = vpop.f32.mrb[0].mxu0
        %v1227 = vadd.f32 %v1110, %v1226
        %v1228 = vpop.f32.mrb[0].mxu0
        %v1229 = vpop.f32.mrb[0].mxu0
        %v1230 = vadd.f32 %v1110, %v1229
        %v1231 = vpop.f32.mrb[0].mxu0
        %1232 = vmatprep.mubr.bf16.mxu0 0
        %1233 = vmatmul.mubr.bf16.gmra.mrb[0].mxu0 %v1078
        %v1234 = vpop.f32.mrb[0].mxu0
        %v1235 = vadd.f32 %v1110, %v1234
        %v1236 = vpop.f32.mrb[0].mxu0
        %v1237 = vpop.f32.mrb[0].mxu0
        %v1238 = vadd.f32 %v1110, %v1237
        %v1239 = vpop.f32.mrb[0].mxu0
        %1240 = vmatprep.mubr.bf16.mxu0 0
        %1241 = vmatmul.mubr.bf16.gmra.mrb[0].mxu0 %v1079
        %v1242 = vpop.f32.mrb[0].mxu0
        %v1243 = vadd.f32 %v1110, %v1242
        %v1244 = vpop.f32.mrb[0].mxu0
        %v1245 = vpop.f32.mrb[0].mxu0
        %v1246 = vadd.f32 %v1110, %v1245
        %v1247 = vpop.f32.mrb[0].mxu0
        %1248 = vmatprep.mubr.bf16.mxu0 0
        %1249 = vmatmul.mubr.bf16.gmra.mrb[0].mxu0 %v1080
        %v1250 = vpop.f32.mrb[0].mxu0
        %v1251 = vadd.f32 %v1110, %v1250
        %v1252 = vpop.f32.mrb[0].mxu0
        %v1253 = vpop.f32.mrb[0].mxu0
        %v1254 = vadd.f32 %v1110, %v1253
        %v1255 = vpop.f32.mrb[0].mxu0
        %1256 = vmatprep.mubr.bf16.mxu0 0
        %1257 = vmatmul.mubr.bf16.gmra.mrb[0].mxu0 %v1081
        %v1258 = vpop.f32.mrb[0].mxu0
        %v1259 = vadd.f32 %v1110, %v1258
        %v1260 = vpop.f32.mrb[0].mxu0
        %v1261 = vpop.f32.mrb[0].mxu0
        %v1262 = vadd.f32 %v1110, %v1261
        %v1263 = vpop.f32.mrb[0].mxu0
        %1264 = vmatprep.mubr.bf16.mxu0 0
        %1265 = vmatmul.mubr.bf16.gmra.mrb[0].mxu0 %v1082
        %v1266 = vpop.f32.mrb[0].mxu0
        %v1267 = vadd.f32 %v1110, %v1266
        %v1268 = vpop.f32.mrb[0].mxu0
        %v1269 = vpop.f32.mrb[0].mxu0
        %v1270 = vadd.f32 %v1110, %v1269
        %v1271 = vpop.f32.mrb[0].mxu0
        %1272 = vmatprep.mubr.bf16.mxu0 0
        %1273 = vmatmul.mubr.bf16.gmra.mrb[0].mxu0 %v1083
        %v1274 = vpop.f32.mrb[0].mxu0
        %v1275 = vadd.f32 %v1110, %v1274
        %v1276 = vpop.f32.mrb[0].mxu0
        %v1277 = vpop.f32.mrb[0].mxu0
        %v1278 = vadd.f32 %v1110, %v1277
        %v1279 = vpop.f32.mrb[0].mxu0
        %1280 = vmatprep.mubr.bf16.mxu0 0
        %1281 = vmatmul.mubr.bf16.gmra.mrb[0].mxu0 %v1084
        %v1282 = vpop.f32.mrb[0].mxu0
        %v1283 = vadd.f32 %v1110, %v1282
        %v1284 = vpop.f32.mrb[0].mxu0
        %v1285 = vpop.f32.mrb[0].mxu0
        %v1286 = vadd.f32 %v1110, %v1285
        %v1287 = vpop.f32.mrb[0].mxu0
        %1288 = vmatprep.mubr.bf16.mxu0 0
        %1289 = vmatmul.mubr.bf16.gmra.mrb[0].mxu0 %v1085
        %v1290 = vpop.f32.mrb[0].mxu0
        %v1291 = vadd.f32 %v1110, %v1290
        %v1292 = vpop.f32.mrb[0].mxu0
        %v1293 = vpop.f32.mrb[0].mxu0
        %v1294 = vadd.f32 %v1110, %v1293
        %v1295 = vpop.f32.mrb[0].mxu0
        %1296 = vmatprep.mubr.bf16.mxu0 0
        %1297 = vmatmul.mubr.bf16.gmra.mrb[0].mxu0 %v1086
        %v1298 = vpop.f32.mrb[0].mxu0
        %v1299 = vadd.f32 %v1110, %v1298
        %v1300 = vpop.f32.mrb[0].mxu0
        %v1301 = vpop.f32.mrb[0].mxu0
        %v1302 = vadd.f32 %v1110, %v1301
        %v1303 = vpop.f32.mrb[0].mxu0
        %1304 = vmatprep.mubr.bf16.mxu0 0
        %1305 = vmatmul.mubr.bf16.gmra.mrb[0].mxu0 %v1087
        %v1306 = vpop.f32.mrb[0].mxu0
        %v1307 = vadd.f32 %v1110, %v1306
        %v1308 = vpop.f32.mrb[0].mxu0
        %v1309 = vpop.f32.mrb[0].mxu0
        %v1310 = vadd.f32 %v1110, %v1309
        %v1311 = vpop.f32.mrb[0].mxu0
        %1312 = vmatprep.mubr.bf16.mxu0 0
        %1313 = vmatmul.mubr.bf16.gmra.mrb[0].mxu0 %v1088
        %v1314 = vpop.f32.mrb[0].mxu0
        %v1315 = vadd.f32 %v1110, %v1314
        %v1316 = vpop.f32.mrb[0].mxu0
        %v1317 = vpop.f32.mrb[0].mxu0
        %v1318 = vadd.f32 %v1110, %v1317
        %v1319 = vpop.f32.mrb[0].mxu0
        %1320 = vdwg.mxu0
        %v1321 = vtanh.pop %v1195
        %v1322 = vtanh.pop %v1198
        %v1323 = vtanh.pop %v1203
        %v1324 = vtanh.pop %v1206
        %v1325 = vtanh.pop %v1211
        %v1326 = vtanh.pop %v1214
        %v1327 = vtanh.pop %v1219
        %v1328 = vtanh.pop %v1222
        %v1329 = vtanh.pop %v1227
        %v1330 = vtanh.pop %v1230
        %v1331 = vtanh.pop %v1235
        %v1332 = vtanh.pop %v1238
        %v1333 = vtanh.pop %v1243
        %v1334 = vtanh.pop %v1246
        %v1335 = vtanh.pop %v1251
        %v1336 = vtanh.pop %v1254
        %v1337 = vtanh.pop %v1259
        %v1338 = vtanh.pop %v1262
        %v1339 = vtanh.pop %v1267
        %v1340 = vtanh.pop %v1270
        %v1341 = vtanh.pop %v1275
        %v1342 = vtanh.pop %v1278
        %v1343 = vtanh.pop %v1283
        %v1344 = vtanh.pop %v1286
        %v1345 = vtanh.pop %v1291
        %v1346 = vtanh.pop %v1294
        %v1347 = vtanh.pop %v1299
        %v1348 = vtanh.pop %v1302
        %v1349 = vtanh.pop %v1307
        %v1350 = vtanh.pop %v1310
        %v1351 = vtanh.pop %v1315
        %v1352 = vtanh.pop %v1318
        %v1353 = vunpack.c.l.bf16 %v793
        %v1354 = vunpack.c.h.bf16 %v793
        %v1355 = vunpack.c.l.bf16 %v794
        %v1356 = vunpack.c.h.bf16 %v794
        %v1357 = vunpack.c.l.bf16 %v795
        %v1358 = vunpack.c.h.bf16 %v795
        %v1359 = vunpack.c.l.bf16 %v796
        %v1360 = vunpack.c.h.bf16 %v796
        %v1361 = vunpack.c.l.bf16 %v797
        %v1362 = vunpack.c.h.bf16 %v797
        %v1363 = vunpack.c.l.bf16 %v798
        %v1364 = vunpack.c.h.bf16 %v798
        %v1365 = vunpack.c.l.bf16 %v799
        %v1366 = vunpack.c.h.bf16 %v799
        %v1367 = vunpack.c.l.bf16 %v800
        %v1368 = vunpack.c.h.bf16 %v800
        %v1369 = vunpack.c.l.bf16 %v801
        %v1370 = vunpack.c.h.bf16 %v801
        %v1371 = vunpack.c.l.bf16 %v802
        %v1372 = vunpack.c.h.bf16 %v802
        %v1373 = vunpack.c.l.bf16 %v803
        %v1374 = vunpack.c.h.bf16 %v803
        %v1375 = vunpack.c.l.bf16 %v804
        %v1376 = vunpack.c.h.bf16 %v804
        %v1377 = vunpack.c.l.bf16 %v805
        %v1378 = vunpack.c.h.bf16 %v805
        %v1379 = vunpack.c.l.bf16 %v806
        %v1380 = vunpack.c.h.bf16 %v806
        %v1381 = vunpack.c.l.bf16 %v807
        %v1382 = vunpack.c.h.bf16 %v807
        %v1383 = vunpack.c.l.bf16 %v808
        %v1384 = vunpack.c.h.bf16 %v808
        %v1385 = vadd.f32 %v1321, %v1353
        %v1386 = vadd.f32 %v1322, %v1354
        %v1387 = vadd.f32 %v1323, %v1355
        %v1388 = vadd.f32 %v1324, %v1356
        %v1389 = vadd.f32 %v1325, %v1357
        %v1390 = vadd.f32 %v1326, %v1358
        %v1391 = vadd.f32 %v1327, %v1359
        %v1392 = vadd.f32 %v1328, %v1360
        %v1393 = vadd.f32 %v1329, %v1361
        %v1394 = vadd.f32 %v1330, %v1362
        %v1395 = vadd.f32 %v1331, %v1363
        %v1396 = vadd.f32 %v1332, %v1364
        %v1397 = vadd.f32 %v1333, %v1365
        %v1398 = vadd.f32 %v1334, %v1366
        %v1399 = vadd.f32 %v1335, %v1367
        %v1400 = vadd.f32 %v1336, %v1368
        %v1401 = vadd.f32 %v1337, %v1369
        %v1402 = vadd.f32 %v1338, %v1370
        %v1403 = vadd.f32 %v1339, %v1371
        %v1404 = vadd.f32 %v1340, %v1372
        %v1405 = vadd.f32 %v1341, %v1373
        %v1406 = vadd.f32 %v1342, %v1374
        %v1407 = vadd.f32 %v1343, %v1375
        %v1408 = vadd.f32 %v1344, %v1376
        %v1409 = vadd.f32 %v1345, %v1377
        %v1410 = vadd.f32 %v1346, %v1378
        %v1411 = vadd.f32 %v1347, %v1379
        %v1412 = vadd.f32 %v1348, %v1380
        %v1413 = vadd.f32 %v1349, %v1381
        %v1414 = vadd.f32 %v1350, %v1382
        %v1415 = vadd.f32 %v1351, %v1383
        %v1416 = vadd.f32 %v1352, %v1384
        %v1417 = vpack.c.bf16 %v1386, %v1385
        %v1418 = vpack.c.bf16 %v1388, %v1387
        %v1419 = vpack.c.bf16 %v1390, %v1389
        %v1420 = vpack.c.bf16 %v1392, %v1391
        %v1421 = vpack.c.bf16 %v1394, %v1393
        %v1422 = vpack.c.bf16 %v1396, %v1395
        %v1423 = vpack.c.bf16 %v1398, %v1397
        %v1424 = vpack.c.bf16 %v1400, %v1399
        %v1425 = vpack.c.bf16 %v1402, %v1401
        %v1426 = vpack.c.bf16 %v1404, %v1403
        %v1427 = vpack.c.bf16 %v1406, %v1405
        %v1428 = vpack.c.bf16 %v1408, %v1407
        %v1429 = vpack.c.bf16 %v1410, %v1409
        %v1430 = vpack.c.bf16 %v1412, %v1411
        %v1431 = vpack.c.bf16 %v1414, %v1413
        %v1432 = vpack.c.bf16 %v1416, %v1415
        %v1433 = vld [vmem:[#allocation10] sm:$0xf]
        %v1434 = vld [vmem:[#allocation10 + $0x4] sm:$0xf]
        %v1435 = vld [vmem:[#allocation10 + $0x8] sm:$0xf]
        %v1436 = vld [vmem:[#allocation10 + $0xc] sm:$0xf]
        %v1437 = vld [vmem:[#allocation10 + $0x10] sm:$0xf]
        %v1438 = vld [vmem:[#allocation10 + $0x14] sm:$0xf]
        %v1439 = vld [vmem:[#allocation10 + $0x18] sm:$0xf]
        %v1440 = vld [vmem:[#allocation10 + $0x1c] sm:$0xf]
        %v1441 = vld [vmem:[#allocation10 + $0x20] sm:$0xf]
        %v1442 = vld [vmem:[#allocation10 + $0x24] sm:$0xf]
        %v1443 = vld [vmem:[#allocation10 + $0x28] sm:$0xf]
        %v1444 = vld [vmem:[#allocation10 + $0x2c] sm:$0xf]
        %v1445 = vld [vmem:[#allocation10 + $0x30] sm:$0xf]
        %v1446 = vld [vmem:[#allocation10 + $0x34] sm:$0xf]
        %v1447 = vld [vmem:[#allocation10 + $0x38] sm:$0xf]
        %v1448 = vld [vmem:[#allocation10 + $0x3c] sm:$0xf]
        %v1449 = vld [vmem:[%s8] sm:$0x1]
        %v1451 = vlaneseq
        %v1452 = vshrl.u32 %v1451, 7
        %v1453 = vsub.s32 0, %v1452
        %v1454 = vrot.slane %v1449, %v1453
        %v1472 = vunpack.c.l.b16 %v1433
        %v1473 = vunpack.c.l.b16 %v1434
        %v1474 = vunpack.c.l.b16 %v1435
        %v1475 = vunpack.c.l.b16 %v1436
        %v1476 = vunpack.c.l.b16 %v1437
        %v1477 = vunpack.c.l.b16 %v1438
        %v1478 = vunpack.c.l.b16 %v1439
        %v1479 = vunpack.c.l.b16 %v1440
        %v1480 = vunpack.c.l.b16 %v1441
        %v1481 = vunpack.c.l.b16 %v1442
        %v1482 = vunpack.c.l.b16 %v1443
        %v1483 = vunpack.c.l.b16 %v1444
        %v1484 = vunpack.c.l.b16 %v1445
        %v1485 = vunpack.c.l.b16 %v1446
        %v1486 = vunpack.c.l.b16 %v1447
        %v1487 = vunpack.c.l.b16 %v1448
        %v1488 = vpack.c.b16 %v1473, %v1472
        %v1489 = vpack.c.b16 %v1475, %v1474
        %v1490 = vpack.c.b16 %v1477, %v1476
        %v1491 = vpack.c.b16 %v1479, %v1478
        %v1492 = vpack.c.b16 %v1481, %v1480
        %v1493 = vpack.c.b16 %v1483, %v1482
        %v1494 = vpack.c.b16 %v1485, %v1484
        %v1495 = vpack.c.b16 %v1487, %v1486
        %1504 = vmatprep.subr.bf16.mxu0 0
        %1505 = vmatpush1.bf16.msra.mxu0 %v1488
        %1506 = vmatprep.subr.bf16.mxu0 0
        %1507 = vmatpush1.bf16.msra.mxu0 %v1489
        %1508 = vmatprep.subr.bf16.mxu0 0
        %1509 = vmatpush1.bf16.msra.mxu0 %v1490
        %1510 = vmatprep.subr.bf16.mxu0 0
        %1511 = vmatpush1.bf16.msra.mxu0 %v1491
        %1512 = vmatprep.subr.bf16.mxu0 0
        %1513 = vmatpush1.bf16.msra.mxu0 %v1492
        %1514 = vmatprep.subr.bf16.mxu0 0
        %1515 = vmatpush1.bf16.msra.mxu0 %v1493
        %1516 = vmatprep.subr.bf16.mxu0 0
        %1517 = vmatpush1.bf16.msra.mxu0 %v1494
        %1518 = vmatprep.subr.bf16.mxu0 0
        %1519 = vmatpush1.bf16.msra.mxu0 %v1495
        %1520 = vmatprep.subr.bf16.mxu0 0
        %1521 = vmatpush1.bf16.msra.mxu0 0
        %1522 = vmatprep.subr.bf16.mxu0 0
        %1523 = vmatpush1.bf16.msra.mxu0 0
        %1524 = vmatprep.subr.bf16.mxu0 0
        %1525 = vmatpush1.bf16.msra.mxu0 0
        %1526 = vmatprep.subr.bf16.mxu0 0
        %1527 = vmatpush1.bf16.msra.mxu0 0
        %1528 = vmatprep.subr.bf16.mxu0 0
        %1529 = vmatpush1.bf16.msra.mxu0 0
        %1530 = vmatprep.subr.bf16.mxu0 0
        %1531 = vmatpush1.bf16.msra.mxu0 0
        %1532 = vmatprep.subr.bf16.mxu0 0
        %1533 = vmatpush1.bf16.msra.mxu0 0
        %1534 = vmatprep.subr.bf16.mxu0 0
        %1535 = vmatpush1.bf16.msra.mxu0 0
        %1536 = vmatprep.mubr.bf16.mxu0 0
        %1537 = vmatmul.mubr.bf16.gmra.mrb[0].mxu0 %v1417
        %v1538 = vpop.f32.mrb[0].mxu0
        %v1539 = vadd.f32 %v1454, %v1538
        %v1540 = vpop.f32.mrb[0].mxu0
        %v1541 = vpop.f32.mrb[0].mxu0
        %v1542 = vadd.f32 %v1454, %v1541
        %v1543 = vpop.f32.mrb[0].mxu0
        %1544 = vmatprep.mubr.bf16.mxu0 0
        %1545 = vmatmul.mubr.bf16.gmra.mrb[0].mxu0 %v1418
        %v1546 = vpop.f32.mrb[0].mxu0
        %v1547 = vadd.f32 %v1454, %v1546
        %v1548 = vpop.f32.mrb[0].mxu0
        %v1549 = vpop.f32.mrb[0].mxu0
        %v1550 = vadd.f32 %v1454, %v1549
        %v1551 = vpop.f32.mrb[0].mxu0
        %1552 = vmatprep.mubr.bf16.mxu0 0
        %1553 = vmatmul.mubr.bf16.gmra.mrb[0].mxu0 %v1419
        %v1554 = vpop.f32.mrb[0].mxu0
        %v1555 = vadd.f32 %v1454, %v1554
        %v1556 = vpop.f32.mrb[0].mxu0
        %v1557 = vpop.f32.mrb[0].mxu0
        %v1558 = vadd.f32 %v1454, %v1557
        %v1559 = vpop.f32.mrb[0].mxu0
        %1560 = vmatprep.mubr.bf16.mxu0 0
        %1561 = vmatmul.mubr.bf16.gmra.mrb[0].mxu0 %v1420
        %v1562 = vpop.f32.mrb[0].mxu0
        %v1563 = vadd.f32 %v1454, %v1562
        %v1564 = vpop.f32.mrb[0].mxu0
        %v1565 = vpop.f32.mrb[0].mxu0
        %v1566 = vadd.f32 %v1454, %v1565
        %v1567 = vpop.f32.mrb[0].mxu0
        %1568 = vmatprep.mubr.bf16.mxu0 0
        %1569 = vmatmul.mubr.bf16.gmra.mrb[0].mxu0 %v1421
        %v1570 = vpop.f32.mrb[0].mxu0
        %v1571 = vadd.f32 %v1454, %v1570
        %v1572 = vpop.f32.mrb[0].mxu0
        %v1573 = vpop.f32.mrb[0].mxu0
        %v1574 = vadd.f32 %v1454, %v1573
        %v1575 = vpop.f32.mrb[0].mxu0
        %1576 = vmatprep.mubr.bf16.mxu0 0
        %1577 = vmatmul.mubr.bf16.gmra.mrb[0].mxu0 %v1422
        %v1578 = vpop.f32.mrb[0].mxu0
        %v1579 = vadd.f32 %v1454, %v1578
        %v1580 = vpop.f32.mrb[0].mxu0
        %v1581 = vpop.f32.mrb[0].mxu0
        %v1582 = vadd.f32 %v1454, %v1581
        %v1583 = vpop.f32.mrb[0].mxu0
        %1584 = vmatprep.mubr.bf16.mxu0 0
        %1585 = vmatmul.mubr.bf16.gmra.mrb[0].mxu0 %v1423
        %v1586 = vpop.f32.mrb[0].mxu0
        %v1587 = vadd.f32 %v1454, %v1586
        %v1588 = vpop.f32.mrb[0].mxu0
        %v1589 = vpop.f32.mrb[0].mxu0
        %v1590 = vadd.f32 %v1454, %v1589
        %v1591 = vpop.f32.mrb[0].mxu0
        %1592 = vmatprep.mubr.bf16.mxu0 0
        %1593 = vmatmul.mubr.bf16.gmra.mrb[0].mxu0 %v1424
        %v1594 = vpop.f32.mrb[0].mxu0
        %v1595 = vadd.f32 %v1454, %v1594
        %v1596 = vpop.f32.mrb[0].mxu0
        %v1597 = vpop.f32.mrb[0].mxu0
        %v1598 = vadd.f32 %v1454, %v1597
        %v1599 = vpop.f32.mrb[0].mxu0
        %1600 = vmatprep.mubr.bf16.mxu0 0
        %1601 = vmatmul.mubr.bf16.gmra.mrb[0].mxu0 %v1425
        %v1602 = vpop.f32.mrb[0].mxu0
        %v1603 = vadd.f32 %v1454, %v1602
        %v1604 = vpop.f32.mrb[0].mxu0
        %v1605 = vpop.f32.mrb[0].mxu0
        %v1606 = vadd.f32 %v1454, %v1605
        %v1607 = vpop.f32.mrb[0].mxu0
        %1608 = vmatprep.mubr.bf16.mxu0 0
        %1609 = vmatmul.mubr.bf16.gmra.mrb[0].mxu0 %v1426
        %v1610 = vpop.f32.mrb[0].mxu0
        %v1611 = vadd.f32 %v1454, %v1610
        %v1612 = vpop.f32.mrb[0].mxu0
        %v1613 = vpop.f32.mrb[0].mxu0
        %v1614 = vadd.f32 %v1454, %v1613
        %v1615 = vpop.f32.mrb[0].mxu0
        %1616 = vmatprep.mubr.bf16.mxu0 0
        %1617 = vmatmul.mubr.bf16.gmra.mrb[0].mxu0 %v1427
        %v1618 = vpop.f32.mrb[0].mxu0
        %v1619 = vadd.f32 %v1454, %v1618
        %v1620 = vpop.f32.mrb[0].mxu0
        %v1621 = vpop.f32.mrb[0].mxu0
        %v1622 = vadd.f32 %v1454, %v1621
        %v1623 = vpop.f32.mrb[0].mxu0
        %1624 = vmatprep.mubr.bf16.mxu0 0
        %1625 = vmatmul.mubr.bf16.gmra.mrb[0].mxu0 %v1428
        %v1626 = vpop.f32.mrb[0].mxu0
        %v1627 = vadd.f32 %v1454, %v1626
        %v1628 = vpop.f32.mrb[0].mxu0
        %v1629 = vpop.f32.mrb[0].mxu0
        %v1630 = vadd.f32 %v1454, %v1629
        %v1631 = vpop.f32.mrb[0].mxu0
        %1632 = vmatprep.mubr.bf16.mxu0 0
        %1633 = vmatmul.mubr.bf16.gmra.mrb[0].mxu0 %v1429
        %v1634 = vpop.f32.mrb[0].mxu0
        %v1635 = vadd.f32 %v1454, %v1634
        %v1636 = vpop.f32.mrb[0].mxu0
        %v1637 = vpop.f32.mrb[0].mxu0
        %v1638 = vadd.f32 %v1454, %v1637
        %v1639 = vpop.f32.mrb[0].mxu0
        %1640 = vmatprep.mubr.bf16.mxu0 0
        %1641 = vmatmul.mubr.bf16.gmra.mrb[0].mxu0 %v1430
        %v1642 = vpop.f32.mrb[0].mxu0
        %v1643 = vadd.f32 %v1454, %v1642
        %v1644 = vpop.f32.mrb[0].mxu0
        %v1645 = vpop.f32.mrb[0].mxu0
        %v1646 = vadd.f32 %v1454, %v1645
        %v1647 = vpop.f32.mrb[0].mxu0
        %1648 = vmatprep.mubr.bf16.mxu0 0
        %1649 = vmatmul.mubr.bf16.gmra.mrb[0].mxu0 %v1431
        %v1650 = vpop.f32.mrb[0].mxu0
        %v1651 = vadd.f32 %v1454, %v1650
        %v1652 = vpop.f32.mrb[0].mxu0
        %v1653 = vpop.f32.mrb[0].mxu0
        %v1654 = vadd.f32 %v1454, %v1653
        %v1655 = vpop.f32.mrb[0].mxu0
        %1656 = vmatprep.mubr.bf16.mxu0 0
        %1657 = vmatmul.mubr.bf16.gmra.mrb[0].mxu0 %v1432
        %v1658 = vpop.f32.mrb[0].mxu0
        %v1659 = vadd.f32 %v1454, %v1658
        %v1660 = vpop.f32.mrb[0].mxu0
        %v1661 = vpop.f32.mrb[0].mxu0
        %v1662 = vadd.f32 %v1454, %v1661
        %v1663 = vpop.f32.mrb[0].mxu0
        %1664 = vdwg.mxu0
        %v1665 = vtanh.pop %v1539
        %v1666 = vtanh.pop %v1542
        %v1667 = vtanh.pop %v1547
        %v1668 = vtanh.pop %v1550
        %v1669 = vtanh.pop %v1555
        %v1670 = vtanh.pop %v1558
        %v1671 = vtanh.pop %v1563
        %v1672 = vtanh.pop %v1566
        %v1673 = vtanh.pop %v1571
        %v1674 = vtanh.pop %v1574
        %v1675 = vtanh.pop %v1579
        %v1676 = vtanh.pop %v1582
        %v1677 = vtanh.pop %v1587
        %v1678 = vtanh.pop %v1590
        %v1679 = vtanh.pop %v1595
        %v1680 = vtanh.pop %v1598
        %v1681 = vtanh.pop %v1603
        %v1682 = vtanh.pop %v1606
        %v1683 = vtanh.pop %v1611
        %v1684 = vtanh.pop %v1614
        %v1685 = vtanh.pop %v1619
        %v1686 = vtanh.pop %v1622
        %v1687 = vtanh.pop %v1627
        %v1688 = vtanh.pop %v1630
        %v1689 = vtanh.pop %v1635
        %v1690 = vtanh.pop %v1638
        %v1691 = vtanh.pop %v1643
        %v1692 = vtanh.pop %v1646
        %v1693 = vtanh.pop %v1651
        %v1694 = vtanh.pop %v1654
        %v1695 = vtanh.pop %v1659
        %v1696 = vtanh.pop %v1662
        %v1697 = vunpack.c.l.bf16 %v1073
        %v1698 = vunpack.c.h.bf16 %v1073
        %v1699 = vunpack.c.l.bf16 %v1074
        %v1700 = vunpack.c.h.bf16 %v1074
        %v1701 = vunpack.c.l.bf16 %v1075
        %v1702 = vunpack.c.h.bf16 %v1075
        %v1703 = vunpack.c.l.bf16 %v1076
        %v1704 = vunpack.c.h.bf16 %v1076
        %v1705 = vunpack.c.l.bf16 %v1077
        %v1706 = vunpack.c.h.bf16 %v1077
        %v1707 = vunpack.c.l.bf16 %v1078
        %v1708 = vunpack.c.h.bf16 %v1078
        %v1709 = vunpack.c.l.bf16 %v1079
        %v1710 = vunpack.c.h.bf16 %v1079
        %v1711 = vunpack.c.l.bf16 %v1080
        %v1712 = vunpack.c.h.bf16 %v1080
        %v1713 = vunpack.c.l.bf16 %v1081
        %v1714 = vunpack.c.h.bf16 %v1081
        %v1715 = vunpack.c.l.bf16 %v1082
        %v1716 = vunpack.c.h.bf16 %v1082
        %v1717 = vunpack.c.l.bf16 %v1083
        %v1718 = vunpack.c.h.bf16 %v1083
        %v1719 = vunpack.c.l.bf16 %v1084
        %v1720 = vunpack.c.h.bf16 %v1084
        %v1721 = vunpack.c.l.bf16 %v1085
        %v1722 = vunpack.c.h.bf16 %v1085
        %v1723 = vunpack.c.l.bf16 %v1086
        %v1724 = vunpack.c.h.bf16 %v1086
        %v1725 = vunpack.c.l.bf16 %v1087
        %v1726 = vunpack.c.h.bf16 %v1087
        %v1727 = vunpack.c.l.bf16 %v1088
        %v1728 = vunpack.c.h.bf16 %v1088
        %v1729 = vadd.f32 %v1665, %v1697
        %v1730 = vadd.f32 %v1666, %v1698
        %v1731 = vadd.f32 %v1667, %v1699
        %v1732 = vadd.f32 %v1668, %v1700
        %v1733 = vadd.f32 %v1669, %v1701
        %v1734 = vadd.f32 %v1670, %v1702
        %v1735 = vadd.f32 %v1671, %v1703
        %v1736 = vadd.f32 %v1672, %v1704
        %v1737 = vadd.f32 %v1673, %v1705
        %v1738 = vadd.f32 %v1674, %v1706
        %v1739 = vadd.f32 %v1675, %v1707
        %v1740 = vadd.f32 %v1676, %v1708
        %v1741 = vadd.f32 %v1677, %v1709
        %v1742 = vadd.f32 %v1678, %v1710
        %v1743 = vadd.f32 %v1679, %v1711
        %v1744 = vadd.f32 %v1680, %v1712
        %v1745 = vadd.f32 %v1681, %v1713
        %v1746 = vadd.f32 %v1682, %v1714
        %v1747 = vadd.f32 %v1683, %v1715
        %v1748 = vadd.f32 %v1684, %v1716
        %v1749 = vadd.f32 %v1685, %v1717
        %v1750 = vadd.f32 %v1686, %v1718
        %v1751 = vadd.f32 %v1687, %v1719
        %v1752 = vadd.f32 %v1688, %v1720
        %v1753 = vadd.f32 %v1689, %v1721
        %v1754 = vadd.f32 %v1690, %v1722
        %v1755 = vadd.f32 %v1691, %v1723
        %v1756 = vadd.f32 %v1692, %v1724
        %v1757 = vadd.f32 %v1693, %v1725
        %v1758 = vadd.f32 %v1694, %v1726
        %v1759 = vadd.f32 %v1695, %v1727
        %v1760 = vadd.f32 %v1696, %v1728
        %v1761 = vpack.c.bf16 %v1730, %v1729
        %v1762 = vpack.c.bf16 %v1732, %v1731
        %v1763 = vpack.c.bf16 %v1734, %v1733
        %v1764 = vpack.c.bf16 %v1736, %v1735
        %v1765 = vpack.c.bf16 %v1738, %v1737
        %v1766 = vpack.c.bf16 %v1740, %v1739
        %v1767 = vpack.c.bf16 %v1742, %v1741
        %v1768 = vpack.c.bf16 %v1744, %v1743
        %v1769 = vpack.c.bf16 %v1746, %v1745
        %v1770 = vpack.c.bf16 %v1748, %v1747
        %v1771 = vpack.c.bf16 %v1750, %v1749
        %v1772 = vpack.c.bf16 %v1752, %v1751
        %v1773 = vpack.c.bf16 %v1754, %v1753
        %v1774 = vpack.c.bf16 %v1756, %v1755
        %v1775 = vpack.c.bf16 %v1758, %v1757
        %v1776 = vpack.c.bf16 %v1760, %v1759
        %v1777 = vld [vmem:[#allocation11] sm:$0xf]
        %v1778 = vld [vmem:[#allocation11 + $0x4] sm:$0xf]
        %v1779 = vld [vmem:[#allocation11 + $0x8] sm:$0xf]
        %v1780 = vld [vmem:[#allocation11 + $0xc] sm:$0xf]
        %v1781 = vld [vmem:[#allocation11 + $0x10] sm:$0xf]
        %v1782 = vld [vmem:[#allocation11 + $0x14] sm:$0xf]
        %v1783 = vld [vmem:[#allocation11 + $0x18] sm:$0xf]
        %v1784 = vld [vmem:[#allocation11 + $0x1c] sm:$0xf]
        %v1785 = vld [vmem:[#allocation11 + $0x20] sm:$0xf]
        %v1786 = vld [vmem:[#allocation11 + $0x24] sm:$0xf]
        %v1787 = vld [vmem:[#allocation11 + $0x28] sm:$0xf]
        %v1788 = vld [vmem:[#allocation11 + $0x2c] sm:$0xf]
        %v1789 = vld [vmem:[#allocation11 + $0x30] sm:$0xf]
        %v1790 = vld [vmem:[#allocation11 + $0x34] sm:$0xf]
        %v1791 = vld [vmem:[#allocation11 + $0x38] sm:$0xf]
        %v1792 = vld [vmem:[#allocation11 + $0x3c] sm:$0xf]
        %v1793 = vld [vmem:[%s10] sm:$0x1]
        %v1795 = vlaneseq
        %v1796 = vshrl.u32 %v1795, 7
        %v1797 = vsub.s32 0, %v1796
        %v1798 = vrot.slane %v1793, %v1797
        %v1816 = vunpack.c.l.b16 %v1777
        %v1817 = vunpack.c.l.b16 %v1778
        %v1818 = vunpack.c.l.b16 %v1779
        %v1819 = vunpack.c.l.b16 %v1780
        %v1820 = vunpack.c.l.b16 %v1781
        %v1821 = vunpack.c.l.b16 %v1782
        %v1822 = vunpack.c.l.b16 %v1783
        %v1823 = vunpack.c.l.b16 %v1784
        %v1824 = vunpack.c.l.b16 %v1785
        %v1825 = vunpack.c.l.b16 %v1786
        %v1826 = vunpack.c.l.b16 %v1787
        %v1827 = vunpack.c.l.b16 %v1788
        %v1828 = vunpack.c.l.b16 %v1789
        %v1829 = vunpack.c.l.b16 %v1790
        %v1830 = vunpack.c.l.b16 %v1791
        %v1831 = vunpack.c.l.b16 %v1792
        %v1832 = vpack.c.b16 %v1817, %v1816
        %v1833 = vpack.c.b16 %v1819, %v1818
        %v1834 = vpack.c.b16 %v1821, %v1820
        %v1835 = vpack.c.b16 %v1823, %v1822
        %v1836 = vpack.c.b16 %v1825, %v1824
        %v1837 = vpack.c.b16 %v1827, %v1826
        %v1838 = vpack.c.b16 %v1829, %v1828
        %v1839 = vpack.c.b16 %v1831, %v1830
        %1848 = vmatprep.subr.bf16.mxu0 0
        %1849 = vmatpush1.bf16.msra.mxu0 %v1832
        %1850 = vmatprep.subr.bf16.mxu0 0
        %1851 = vmatpush1.bf16.msra.mxu0 %v1833
        %1852 = vmatprep.subr.bf16.mxu0 0
        %1853 = vmatpush1.bf16.msra.mxu0 %v1834
        %1854 = vmatprep.subr.bf16.mxu0 0
        %1855 = vmatpush1.bf16.msra.mxu0 %v1835
        %1856 = vmatprep.subr.bf16.mxu0 0
        %1857 = vmatpush1.bf16.msra.mxu0 %v1836
        %1858 = vmatprep.subr.bf16.mxu0 0
        %1859 = vmatpush1.bf16.msra.mxu0 %v1837
        %1860 = vmatprep.subr.bf16.mxu0 0
        %1861 = vmatpush1.bf16.msra.mxu0 %v1838
        %1862 = vmatprep.subr.bf16.mxu0 0
        %1863 = vmatpush1.bf16.msra.mxu0 %v1839
        %1864 = vmatprep.subr.bf16.mxu0 0
        %1865 = vmatpush1.bf16.msra.mxu0 0
        %1866 = vmatprep.subr.bf16.mxu0 0
        %1867 = vmatpush1.bf16.msra.mxu0 0
        %1868 = vmatprep.subr.bf16.mxu0 0
        %1869 = vmatpush1.bf16.msra.mxu0 0
        %1870 = vmatprep.subr.bf16.mxu0 0
        %1871 = vmatpush1.bf16.msra.mxu0 0
        %1872 = vmatprep.subr.bf16.mxu0 0
        %1873 = vmatpush1.bf16.msra.mxu0 0
        %1874 = vmatprep.subr.bf16.mxu0 0
        %1875 = vmatpush1.bf16.msra.mxu0 0
        %1876 = vmatprep.subr.bf16.mxu0 0
        %1877 = vmatpush1.bf16.msra.mxu0 0
        %1878 = vmatprep.subr.bf16.mxu0 0
        %1879 = vmatpush1.bf16.msra.mxu0 0
        %1880 = vmatprep.mubr.bf16.mxu0 0
        %1881 = vmatmul.mubr.bf16.gmra.mrb[0].mxu0 %v1761
        %v1882 = vpop.f32.mrb[0].mxu0
        %v1883 = vadd.f32 %v1798, %v1882
        %v1884 = vpop.f32.mrb[0].mxu0
        %v1885 = vpop.f32.mrb[0].mxu0
        %v1886 = vadd.f32 %v1798, %v1885
        %v1887 = vpop.f32.mrb[0].mxu0
        %1888 = vmatprep.mubr.bf16.mxu0 0
        %1889 = vmatmul.mubr.bf16.gmra.mrb[0].mxu0 %v1762
        %v1890 = vpop.f32.mrb[0].mxu0
        %v1891 = vadd.f32 %v1798, %v1890
        %v1892 = vpop.f32.mrb[0].mxu0
        %v1893 = vpop.f32.mrb[0].mxu0
        %v1894 = vadd.f32 %v1798, %v1893
        %v1895 = vpop.f32.mrb[0].mxu0
        %1896 = vmatprep.mubr.bf16.mxu0 0
        %1897 = vmatmul.mubr.bf16.gmra.mrb[0].mxu0 %v1763
        %v1898 = vpop.f32.mrb[0].mxu0
        %v1899 = vadd.f32 %v1798, %v1898
        %v1900 = vpop.f32.mrb[0].mxu0
        %v1901 = vpop.f32.mrb[0].mxu0
        %v1902 = vadd.f32 %v1798, %v1901
        %v1903 = vpop.f32.mrb[0].mxu0
        %1904 = vmatprep.mubr.bf16.mxu0 0
        %1905 = vmatmul.mubr.bf16.gmra.mrb[0].mxu0 %v1764
        %v1906 = vpop.f32.mrb[0].mxu0
        %v1907 = vadd.f32 %v1798, %v1906
        %v1908 = vpop.f32.mrb[0].mxu0
        %v1909 = vpop.f32.mrb[0].mxu0
        %v1910 = vadd.f32 %v1798, %v1909
        %v1911 = vpop.f32.mrb[0].mxu0
        %1912 = vmatprep.mubr.bf16.mxu0 0
        %1913 = vmatmul.mubr.bf16.gmra.mrb[0].mxu0 %v1765
        %v1914 = vpop.f32.mrb[0].mxu0
        %v1915 = vadd.f32 %v1798, %v1914
        %v1916 = vpop.f32.mrb[0].mxu0
        %v1917 = vpop.f32.mrb[0].mxu0
        %v1918 = vadd.f32 %v1798, %v1917
        %v1919 = vpop.f32.mrb[0].mxu0
        %1920 = vmatprep.mubr.bf16.mxu0 0
        %1921 = vmatmul.mubr.bf16.gmra.mrb[0].mxu0 %v1766
        %v1922 = vpop.f32.mrb[0].mxu0
        %v1923 = vadd.f32 %v1798, %v1922
        %v1924 = vpop.f32.mrb[0].mxu0
        %v1925 = vpop.f32.mrb[0].mxu0
        %v1926 = vadd.f32 %v1798, %v1925
        %v1927 = vpop.f32.mrb[0].mxu0
        %1928 = vmatprep.mubr.bf16.mxu0 0
        %1929 = vmatmul.mubr.bf16.gmra.mrb[0].mxu0 %v1767
        %v1930 = vpop.f32.mrb[0].mxu0
        %v1931 = vadd.f32 %v1798, %v1930
        %v1932 = vpop.f32.mrb[0].mxu0
        %v1933 = vpop.f32.mrb[0].mxu0
        %v1934 = vadd.f32 %v1798, %v1933
        %v1935 = vpop.f32.mrb[0].mxu0
        %1936 = vmatprep.mubr.bf16.mxu0 0
        %1937 = vmatmul.mubr.bf16.gmra.mrb[0].mxu0 %v1768
        %v1938 = vpop.f32.mrb[0].mxu0
        %v1939 = vadd.f32 %v1798, %v1938
        %v1940 = vpop.f32.mrb[0].mxu0
        %v1941 = vpop.f32.mrb[0].mxu0
        %v1942 = vadd.f32 %v1798, %v1941
        %v1943 = vpop.f32.mrb[0].mxu0
        %1944 = vmatprep.mubr.bf16.mxu0 0
        %1945 = vmatmul.mubr.bf16.gmra.mrb[0].mxu0 %v1769
        %v1946 = vpop.f32.mrb[0].mxu0
        %v1947 = vadd.f32 %v1798, %v1946
        %v1948 = vpop.f32.mrb[0].mxu0
        %v1949 = vpop.f32.mrb[0].mxu0
        %v1950 = vadd.f32 %v1798, %v1949
        %v1951 = vpop.f32.mrb[0].mxu0
        %1952 = vmatprep.mubr.bf16.mxu0 0
        %1953 = vmatmul.mubr.bf16.gmra.mrb[0].mxu0 %v1770
        %v1954 = vpop.f32.mrb[0].mxu0
        %v1955 = vadd.f32 %v1798, %v1954
        %v1956 = vpop.f32.mrb[0].mxu0
        %v1957 = vpop.f32.mrb[0].mxu0
        %v1958 = vadd.f32 %v1798, %v1957
        %v1959 = vpop.f32.mrb[0].mxu0
        %1960 = vmatprep.mubr.bf16.mxu0 0
        %1961 = vmatmul.mubr.bf16.gmra.mrb[0].mxu0 %v1771
        %v1962 = vpop.f32.mrb[0].mxu0
        %v1963 = vadd.f32 %v1798, %v1962
        %v1964 = vpop.f32.mrb[0].mxu0
        %v1965 = vpop.f32.mrb[0].mxu0
        %v1966 = vadd.f32 %v1798, %v1965
        %v1967 = vpop.f32.mrb[0].mxu0
        %1968 = vmatprep.mubr.bf16.mxu0 0
        %1969 = vmatmul.mubr.bf16.gmra.mrb[0].mxu0 %v1772
        %v1970 = vpop.f32.mrb[0].mxu0
        %v1971 = vadd.f32 %v1798, %v1970
        %v1972 = vpop.f32.mrb[0].mxu0
        %v1973 = vpop.f32.mrb[0].mxu0
        %v1974 = vadd.f32 %v1798, %v1973
        %v1975 = vpop.f32.mrb[0].mxu0
        %1976 = vmatprep.mubr.bf16.mxu0 0
        %1977 = vmatmul.mubr.bf16.gmra.mrb[0].mxu0 %v1773
        %v1978 = vpop.f32.mrb[0].mxu0
        %v1979 = vadd.f32 %v1798, %v1978
        %v1980 = vpop.f32.mrb[0].mxu0
        %v1981 = vpop.f32.mrb[0].mxu0
        %v1982 = vadd.f32 %v1798, %v1981
        %v1983 = vpop.f32.mrb[0].mxu0
        %1984 = vmatprep.mubr.bf16.mxu0 0
        %1985 = vmatmul.mubr.bf16.gmra.mrb[0].mxu0 %v1774
        %v1986 = vpop.f32.mrb[0].mxu0
        %v1987 = vadd.f32 %v1798, %v1986
        %v1988 = vpop.f32.mrb[0].mxu0
        %v1989 = vpop.f32.mrb[0].mxu0
        %v1990 = vadd.f32 %v1798, %v1989
        %v1991 = vpop.f32.mrb[0].mxu0
        %1992 = vmatprep.mubr.bf16.mxu0 0
        %1993 = vmatmul.mubr.bf16.gmra.mrb[0].mxu0 %v1775
        %v1994 = vpop.f32.mrb[0].mxu0
        %v1995 = vadd.f32 %v1798, %v1994
        %v1996 = vpop.f32.mrb[0].mxu0
        %v1997 = vpop.f32.mrb[0].mxu0
        %v1998 = vadd.f32 %v1798, %v1997
        %v1999 = vpop.f32.mrb[0].mxu0
        %2000 = vmatprep.mubr.bf16.mxu0 0
        %2001 = vmatmul.mubr.bf16.gmra.mrb[0].mxu0 %v1776
        %v2002 = vpop.f32.mrb[0].mxu0
        %v2003 = vadd.f32 %v1798, %v2002
        %v2004 = vpop.f32.mrb[0].mxu0
        %v2005 = vpop.f32.mrb[0].mxu0
        %v2006 = vadd.f32 %v1798, %v2005
        %v2007 = vpop.f32.mrb[0].mxu0
        %2008 = vdwg.mxu0
        %2009 = vst [vmem:[%s477] sm:$0xff] %v1883
        %2010 = vst [vmem:[%s477 + $0x8] sm:$0xff] %v1886
        %2011 = vst [vmem:[%s477 + $0x10] sm:$0xff] %v1891
        %2012 = vst [vmem:[%s477 + $0x18] sm:$0xff] %v1894
        %2013 = vst [vmem:[%s477 + $0x20] sm:$0xff] %v1899
        %2014 = vst [vmem:[%s477 + $0x28] sm:$0xff] %v1902
        %2015 = vst [vmem:[%s477 + $0x30] sm:$0xff] %v1907
        %2016 = vst [vmem:[%s477 + $0x38] sm:$0xff] %v1910
        %2017 = vst [vmem:[%s477 + $0x40] sm:$0xff] %v1915
        %2018 = vst [vmem:[%s477 + $0x48] sm:$0xff] %v1918
        %2019 = vst [vmem:[%s477 + $0x50] sm:$0xff] %v1923
        %2020 = vst [vmem:[%s477 + $0x58] sm:$0xff] %v1926
        %2021 = vst [vmem:[%s477 + $0x60] sm:$0xff] %v1931
        %2022 = vst [vmem:[%s477 + $0x68] sm:$0xff] %v1934
        %2023 = vst [vmem:[%s477 + $0x70] sm:$0xff] %v1939
        %2024 = vst [vmem:[%s477 + $0x78] sm:$0xff] %v1942
        %2025 = vst [vmem:[%s477 + $0x80] sm:$0xff] %v1947
        %2026 = vst [vmem:[%s477 + $0x88] sm:$0xff] %v1950
        %2027 = vst [vmem:[%s477 + $0x90] sm:$0xff] %v1955
        %2028 = vst [vmem:[%s477 + $0x98] sm:$0xff] %v1958
        %2029 = vst [vmem:[%s477 + $0xa0] sm:$0xff] %v1963
        %2030 = vst [vmem:[%s477 + $0xa8] sm:$0xff] %v1966
        %2031 = vst [vmem:[%s477 + $0xb0] sm:$0xff] %v1971
        %2032 = vst [vmem:[%s477 + $0xb8] sm:$0xff] %v1974
        %2033 = vst [vmem:[%s477 + $0xc0] sm:$0xff] %v1979
        %2034 = vst [vmem:[%s477 + $0xc8] sm:$0xff] %v1982
        %2035 = vst [vmem:[%s477 + $0xd0] sm:$0xff] %v1987
        %2036 = vst [vmem:[%s477 + $0xd8] sm:$0xff] %v1990
        %2037 = vst [vmem:[%s477 + $0xe0] sm:$0xff] %v1995
        %2038 = vst [vmem:[%s477 + $0xe8] sm:$0xff] %v1998
        %2039 = vst [vmem:[%s477 + $0xf0] sm:$0xff] %v2003
        %2040 = vst [vmem:[%s477 + $0xf8] sm:$0xff] %v2006
        %s2041 = sand.u32 %s275, 1
        %s2042 = scalar_lea.sflag [#allocation4], %s2041
        %s2043 = sand.u32 %s275, 1
        %s2044 = smul.addr %s2043, 256
        %s2045 = scalar_lea.vmem [#allocation13], %s2044
        // Predicated region
        $region89: #{tpu_custom_call.1} parent=63 // pred_check
          %p2046 = pneg %p285
        $region90: #{tpu_custom_call.1} parent=63 // pred_check_branch
          %2048 = sbr.rel (%p2046) target = $region92
        $region91: #{tpu_custom_call.1} parent=63 // pred_region
          %s2049 = smul.u32 32, %s31
          %s2051 = ssub.s32 4096, 4096
          %2052 = vsyncadd %s2042, %s2051
          %s2053 = smul.addr %s2049, 128
          %s2054 = scalar_lea.hbm %s11, %s2053
          %s2055 = sshll.u32 %s2045, 4
          %s2056 = int_to_ptr.vmem [resolvable:$true] %s2055
          %2061 = dma.vmem_to_hbm [thread:$0]  %s2056, 4096, %s2054, %s2042, 128, 128, 8
        $region92: #{tpu_custom_call.1} parent=63 // pred_fallthru
          _
      $region64: #{tpu_custom_call.1} parent=5 // pred_fallthru
        _
      %p2062 = scmp.le.s32.totalorder 2, %s26
      // Predicated region
      $region93: #{tpu_custom_call.1} parent=5 // pred_check
        %p2063 = pneg %p2062
      $region94: #{tpu_custom_call.1} parent=5 // pred_check_branch
        %2065 = sbr.rel (%p2063) target = $region96
      $region95: #{tpu_custom_call.1} parent=5 // pred_region
        %s2066 = ssub.s32 %s26, 2
        // Predicated region
        $region97: #{tpu_custom_call.1} parent=95 // pred_check
          %p2067 = pneg %p291
        $region98: #{tpu_custom_call.1} parent=95 // pred_check_branch
          %2069 = sbr.rel (%p2067) target = $region100
        $region99: #{tpu_custom_call.1} parent=95 // pred_region
          %s2070 = sand.u32 %s276, 1
          %s2071 = scalar_lea.sflag [#allocation4], %s2070
          %s2072 = sand.u32 %s276, 1
          %s2073 = smul.addr %s2072, 256
          %s2074 = scalar_lea.vmem [#allocation13], %s2073
          %2075 = dma.done %s2071, 4096
        $region100: #{tpu_custom_call.1} parent=95 // pred_fallthru
          _
      $region96: #{tpu_custom_call.1} parent=5 // pred_fallthru
        _
    $region6: #{tpu_custom_call.1} parent=1 // loop_footer
      %s30 = sadd.s32 1, %s26
    $region7: #{tpu_custom_call.1} parent=1 // loop_footer_branch
      %25 = sbr.rel target = $region3
    $region8: #{tpu_custom_call.1} parent=1 // loop_exit
      _
    %2076 = vsyncpa [#allocation3], 1
    %s2077 = scalar_lea.sflag [#allocation3], 1
    %2078 = vsyncpa %s2077, 1
    %2079 = vsyncpa [#allocation6], 1
    %2080 = vsyncpa [#allocation9], 1
    %2081 = vsyncpa [#allocation12], 1
    %2082 = vsyncpa [#allocation4], 1
    %s2083 = scalar_lea.sflag [#allocation4], 1
    %2084 = vsyncpa %s2083, 1

</llo_original>
